<compile_context>
chip_gen: v5e
topology: v5e:2x2
jax: 0.10.0
libtpu: 0.0.40
codegen_flags: <defaults>
</compile_context>

<pallas_src>
import functools
import math

import jax
import jax.numpy as jnp
from jax.experimental import pallas as pl
from jax.experimental.pallas import tpu as pltpu

# ---------------- synthetic-small config (shapes implied by the module) -------
IM_H, IM_W = 32, 32          # im_data spatial
FEAT_STRIDE = 4              # two stride-2 convs (stand-in for the 1/16 backbone)
NUM_ANCHORS = 3              # A
NUM_ROIS = 8                 # proposals kept (stand-in for post-NMS top-N)
POOL = 4                     # cfg.POOLING_SIZE (small)
HIDDEN = 32                  # _head_to_tail output dim
N_CLASSES = 4                # len(classes)
CLASS_AGNOSTIC = False       # bbox_pred -> 4 * n_classes

_BBOX_XFORM_CLIP = math.log(1000.0 / 16.0)


def _vmem_spec():
    return pl.BlockSpec(memory_space=pltpu.MemorySpace.VMEM)


def _round_up(x, m):
    return ((x + m - 1) // m) * m


# ---------------- Pallas kernel 1: gridded matmul + bias (+relu) ----------------
def _matmul_bias_kernel(x_ref, w_ref, b_ref, o_ref, acc_ref, *, act):
    @pl.when(pl.program_id(2) == 0)
    def _():
        acc_ref[...] = jnp.zeros_like(acc_ref)

    acc_ref[...] += jnp.dot(x_ref[...], w_ref[...],
                            preferred_element_type=jnp.float32)

    @pl.when(pl.program_id(2) == pl.num_programs(2) - 1)
    def _():
        y = acc_ref[...] + b_ref[...]
        if act == "relu":
            y = jnp.maximum(y, 0.0)
        o_ref[...] = y.astype(o_ref.dtype)


def pallas_matmul_bias(x, w, b, act=None, tm=256, tn=256, tk=512):
    """Y = act(X @ W + b), tiled over (M, N, K) with a resident f32 accumulator.

    Inputs are zero-padded to (8,128)-aligned tile multiples so every block is
    lane/sublane dense; the K (reduction) grid axis is last; the two output
    axes are marked "parallel" so v7x can shard them across its TensorCores.
    """
    M, K = x.shape
    K2, N = w.shape
    assert K == K2

    Mp = _round_up(M, 8)
    Kp = _round_up(K, 128)
    Np = _round_up(N, 128)
    tm = min(tm, Mp)
    tn = min(tn, Np)
    tk = min(tk, Kp)
    Mp = _round_up(Mp, tm)
    Kp = _round_up(Kp, tk)
    Np = _round_up(Np, tn)

    xp = jnp.pad(x.astype(jnp.float32), ((0, Mp - M), (0, Kp - K)))
    wp = jnp.pad(w.astype(jnp.float32), ((0, Kp - K), (0, Np - N)))
    bp = jnp.pad(b.reshape(1, N).astype(jnp.float32), ((0, 0), (0, Np - N)))

    grid = (Mp // tm, Np // tn, Kp // tk)
    out = pl.pallas_call(
        functools.partial(_matmul_bias_kernel, act=act),
        out_shape=jax.ShapeDtypeStruct((Mp, Np), jnp.float32),
        grid_spec=pltpu.PrefetchScalarGridSpec(
            num_scalar_prefetch=0,
            grid=grid,
            in_specs=[
                pl.BlockSpec((tm, tk), lambda i, j, k: (i, k)),
                pl.BlockSpec((tk, tn), lambda i, j, k: (k, j)),
                pl.BlockSpec((1, tn), lambda i, j, k: (0, j)),
            ],
            out_specs=pl.BlockSpec((tm, tn), lambda i, j, k: (i, j)),
            scratch_shapes=[pltpu.VMEM((tm, tn), jnp.float32)],
        ),
        compiler_params=pltpu.CompilerParams(
            dimension_semantics=("parallel", "parallel", "arbitrary"),
            vmem_limit_bytes=32 * 1024 * 1024,
        ),
    )(xp, wp, bp)
    return out[:M, :N]


# ---------------- Pallas kernel 2: fused RPN ------------------------------------
# Operand layouts are transposed (channels / coordinates on sublanes, spatial
# locations on lanes).  Anchor coordinates and bbox deltas are laid out
# coordinate-major (A-row slabs) so the whole bbox transform is slab-wise VPU
# math with direct row-block stores (no per-anchor loop, no concatenate).
def _rpn_fused_kernel(pT_ref, wcT_ref, bc_ref, whT_ref, bh_ref, anchT_ref,
                      boxes_ref, scores_ref, *, num_anchors, im_h, im_w):
    # 3x3 RPN conv + ReLU; rpn_feat never leaves VMEM.
    featT = jnp.dot(wcT_ref[...], pT_ref[...],
                    preferred_element_type=jnp.float32) + bc_ref[...]
    featT = jnp.maximum(featT, 0.0)                                  # (Cmid, L)

    # fused 1x1 heads: rows = [bg*A, fg*A, dx*A, dy*A, dw*A, dh*A]
    headT = jnp.dot(whT_ref[...], featT,
                    preferred_element_type=jnp.float32) + bh_ref[...]  # (6A, L)

    A = num_anchors
    bg = headT[0:A, :]
    fg = headT[A:2 * A, :]
    # softmax over {bg, fg} then take fg == sigmoid(fg - bg); exp runs on EUP.
    scores_ref[...] = jax.nn.sigmoid(fg - bg)                        # (A, L)

    # coordinate-major anchor slabs
    x1 = anchT_ref[0 * A:1 * A, :]
    y1 = anchT_ref[1 * A:2 * A, :]
    x2 = anchT_ref[2 * A:3 * A, :]
    y2 = anchT_ref[3 * A:4 * A, :]
    dx = headT[2 * A:3 * A, :]
    dy = headT[3 * A:4 * A, :]
    dw = jnp.minimum(headT[4 * A:5 * A, :], _BBOX_XFORM_CLIP)
    dh = jnp.minimum(headT[5 * A:6 * A, :], _BBOX_XFORM_CLIP)

    w = x2 - x1 + 1.0
    h = y2 - y1 + 1.0
    cx = x1 + 0.5 * w
    cy = y1 + 0.5 * h
    pcx = dx * w + cx
    pcy = dy * h + cy
    pw = jnp.exp(dw) * w
    ph = jnp.exp(dh) * h

    boxes_ref[0 * A:1 * A, :] = jnp.clip(pcx - 0.5 * pw, 0.0, im_w - 1.0)
    boxes_ref[1 * A:2 * A, :] = jnp.clip(pcy - 0.5 * ph, 0.0, im_h - 1.0)
    boxes_ref[2 * A:3 * A, :] = jnp.clip(pcx + 0.5 * pw, 0.0, im_w - 1.0)
    boxes_ref[3 * A:4 * A, :] = jnp.clip(pcy + 0.5 * ph, 0.0, im_h - 1.0)


def rpn_fused(patchesT, wconvT, bconv, wheadT, bhead, anchorsT, im_h, im_w):
    # TODO(synk): at real feature sizes this should be gridded over L (lane)
    # tiles; at the toy L=64 a single VMEM block is optimal.
    A = NUM_ANCHORS
    L = patchesT.shape[1]
    boxes, scores = pl.pallas_call(
        functools.partial(_rpn_fused_kernel, num_anchors=A,
                          im_h=float(im_h), im_w=float(im_w)),
        out_shape=(jax.ShapeDtypeStruct((4 * A, L), jnp.float32),
                   jax.ShapeDtypeStruct((A, L), jnp.float32)),
        in_specs=[_vmem_spec()] * 6,
        out_specs=(_vmem_spec(), _vmem_spec()),
    )(patchesT.astype(jnp.float32), wconvT.astype(jnp.float32),
      bconv.reshape(-1, 1).astype(jnp.float32),
      wheadT.astype(jnp.float32), bhead.reshape(-1, 1).astype(jnp.float32),
      anchorsT.astype(jnp.float32))
    return boxes, scores


# ---------------- Pallas kernel 3: fused RCNN tail ------------------------------
# Runs in (R, K) orientation (x @ W) so no wrapper-side transposes are needed;
# cls softmax and bbox head are written as two dense outputs (no concatenate).
def _tail_fused_kernel(x_ref, wfc_ref, bfc_ref, wh_ref, bh_ref,
                       prob_ref, bbox_ref, *, n_classes):
    h = jnp.dot(x_ref[...], wfc_ref[...],
                preferred_element_type=jnp.float32) + bfc_ref[...]
    h = jnp.maximum(h, 0.0)                                          # (R, HIDDEN)
    head = jnp.dot(h, wh_ref[...],
                   preferred_element_type=jnp.float32) + bh_ref[...]  # (R, 5*NC)
    cls = head[:, :n_classes]
    m = jnp.max(cls, axis=1, keepdims=True)
    e = jnp.exp(cls - m)
    prob_ref[...] = e / jnp.sum(e, axis=1, keepdims=True)
    bbox_ref[...] = head[:, n_classes:]


def tail_fused(flat, fc_w, fc_b, head_w, head_b):
    """flat: (R, P*P*C). Returns cls_prob (R, NC) and bbox_pred (R, 4*NC)."""
    R = flat.shape[0]
    n_out = head_w.shape[1]
    prob, bbox = pl.pallas_call(
        functools.partial(_tail_fused_kernel, n_classes=N_CLASSES),
        out_shape=(jax.ShapeDtypeStruct((R, N_CLASSES), jnp.float32),
                   jax.ShapeDtypeStruct((R, n_out - N_CLASSES), jnp.float32)),
        in_specs=[_vmem_spec()] * 5,
        out_specs=(_vmem_spec(), _vmem_spec()),
    )(flat.astype(jnp.float32), fc_w.astype(jnp.float32),
      fc_b.reshape(1, -1).astype(jnp.float32),
      head_w.astype(jnp.float32), head_b.reshape(1, -1).astype(jnp.float32))
    return prob, bbox


# ---------------- conv via im2col + Pallas matmul (NHWC) ------------------------
def _im2col_nhwc(x, kh, kw, stride, pad):
    # TODO(synk): im2col is XLA glue (materializes KH*KW shifted copies); at
    # real Faster R-CNN feature sizes this should move inside the gridded
    # Pallas kernel (shift/accumulate over (kh,kw) taps into the VMEM acc).
    N, H, W, C = x.shape
    if pad > 0:
        x = jnp.pad(x, ((0, 0), (pad, pad), (pad, pad), (0, 0)))
    OH = (H + 2 * pad - kh) // stride + 1
    OW = (W + 2 * pad - kw) // stride + 1
    cols = [x[:, i:i + stride * OH:stride, j:j + stride * OW:stride, :]
            for i in range(kh) for j in range(kw)]
    p = jnp.concatenate(cols, axis=-1)                 # (N, OH, OW, KH*KW*C)
    return p.reshape(N * OH * OW, kh * kw * C), OH, OW


def conv2d_nhwc(x, w, b, stride=1, pad=0, act=None):
    """x: (N,H,W,C), w: (KH,KW,Cin,OC). Output NHWC (no transpose needed)."""
    N = x.shape[0]
    KH, KW, C, OC = w.shape
    p, OH, OW = _im2col_nhwc(x, KH, KW, stride, pad)
    y = pallas_matmul_bias(p, w.reshape(KH * KW * C, OC), b, act=act)
    return y.reshape(N, OH, OW, OC)


# ---------------- RPN anchors / RoIAlign glue (index math only) -----------------
def generate_anchors(hf, wf, stride):
    sizes = jnp.array([8.0, 16.0, 24.0], jnp.float32)    # A = 3 square anchors
    half = (sizes - 1.0) / 2.0
    base = jnp.stack([-half, -half, half, half], axis=1)  # (A, 4)
    shift_x = jnp.arange(wf, dtype=jnp.float32) * stride
    shift_y = jnp.arange(hf, dtype=jnp.float32) * stride
    sx, sy = jnp.meshgrid(shift_x, shift_y)               # (hf, wf)
    shifts = jnp.stack([sx.ravel(), sy.ravel(), sx.ravel(), sy.ravel()], axis=1)
    return (shifts[:, None, :] + base[None, :, :]).reshape(-1, 4)  # ((h*W+w)*A+a, 4)


def roi_align_matrix(rois, feat_h, feat_w, pooled, scale):
    """Bilinear sampling matrix W (R*P*P, H*W) built as an outer product of
    1-D triangle kernels (no scatter-adds). One sample per bin (bin center).
    TODO(synk): exact RoIAlignAvg (aligned 2x grid then avg_pool2d) not
    reproduced; at real scale replace the dense matmul with an in-kernel
    4-corner gather (scalar-prefetched corner indices in SMEM)."""
    x1 = rois[:, 1] * scale
    y1 = rois[:, 2] * scale
    x2 = rois[:, 3] * scale
    y2 = rois[:, 4] * scale
    roi_w = jnp.maximum(x2 - x1 + 1.0, 1.0)
    roi_h = jnp.maximum(y2 - y1 + 1.0, 1.0)
    bin_w = roi_w / pooled
    bin_h = roi_h / pooled
    grid = jnp.arange(pooled, dtype=jnp.float32) + 0.5
    sy = jnp.clip(y1[:, None] + grid[None, :] * bin_h[:, None], 0.0, feat_h - 1.0)
    sx = jnp.clip(x1[:, None] + grid[None, :] * bin_w[:, None], 0.0, feat_w - 1.0)
    hs = jnp.arange(feat_h, dtype=jnp.float32)
    ws = jnp.arange(feat_w, dtype=jnp.float32)
    wy = jnp.maximum(0.0, 1.0 - jnp.abs(sy[:, :, None] - hs[None, None, :]))  # (R,P,H)
    wx = jnp.maximum(0.0, 1.0 - jnp.abs(sx[:, :, None] - ws[None, None, :]))  # (R,P,W)
    wmat = wy[:, :, None, :, None] * wx[:, None, :, None, :]                  # (R,P,P,H,W)
    return wmat.reshape(rois.shape[0] * pooled * pooled, feat_h * feat_w)


# ---------------- parameters (deterministic, matches _init_weights stds) --------
def init_params(key):
    keys = jax.random.split(key, 8)

    def nrm(k, shape, std):
        return jax.random.normal(k, shape, jnp.float32) * std

    C1, C2 = 8, 16
    p = {}
    p["base1_w"] = nrm(keys[0], (3, 3, 3, C1), 0.01)        # (KH,KW,Cin,OC)
    p["base1_b"] = jnp.zeros((C1,), jnp.float32)
    p["base2_w"] = nrm(keys[1], (3, 3, C1, C2), 0.01)
    p["base2_b"] = jnp.zeros((C2,), jnp.float32)
    p["rpn_conv_w"] = nrm(keys[2], (3, 3, C2, C2), 0.01)
    p["rpn_conv_b"] = jnp.zeros((C2,), jnp.float32)
    # 1x1 RPN heads as dense (C, out): cls columns = [bg*A, fg*A] (torch
    # reshape(B,2,-1,W) convention); bbox columns anchor-major (dx,dy,dw,dh).
    p["rpn_cls_w"] = nrm(keys[3], (C2, 2 * NUM_ANCHORS), 0.01)
    p["rpn_cls_b"] = jnp.zeros((2 * NUM_ANCHORS,), jnp.float32)
    p["rpn_bbox_w"] = nrm(keys[4], (C2, 4 * NUM_ANCHORS), 0.01)
    p["rpn_bbox_b"] = jnp.zeros((4 * NUM_ANCHORS,), jnp.float32)
    # _head_to_tail FC over pooled feats flattened as (P, P, C) (NHWC order).
    p["fc_w"] = nrm(keys[5], (POOL * POOL * C2, HIDDEN), 0.01)
    p["fc_b"] = jnp.zeros((HIDDEN,), jnp.float32)
    p["cls_w"] = nrm(keys[6], (HIDDEN, N_CLASSES), 0.01)
    p["cls_b"] = jnp.zeros((N_CLASSES,), jnp.float32)
    p["bbox_w"] = nrm(keys[7], (HIDDEN, 4 * N_CLASSES), 0.001)
    p["bbox_b"] = jnp.zeros((4 * N_CLASSES,), jnp.float32)
    return p


# ---------------- _fasterRCNN.forward (eval path) -------------------------------
def faster_rcnn_forward(params, im_data, im_info, gt_boxes, num_boxes,
                        domain_label=1):
    del im_info, gt_boxes, num_boxes, domain_label   # unused on the eval path
    batch_size = im_data.shape[0]
    x = jnp.transpose(im_data, (0, 2, 3, 1))         # NCHW -> NHWC once at entry

    # RCNN_base1 / RCNN_base2 (synthetic small backbone, stride 2 each)
    local_base_feat = conv2d_nhwc(x, params["base1_w"], params["base1_b"],
                                  stride=2, pad=1, act="relu")
    base_feat = conv2d_nhwc(local_base_feat, params["base2_w"], params["base2_b"],
                            stride=2, pad=1, act="relu")
    B, hf, wf, C = base_feat.shape
    A = NUM_ANCHORS
    L = hf * wf

    # ---------------- RCNN_rpn: one fused kernel ----------------
    # TODO(synk): batch_size == 1 assumed for the RPN/RoI path.
    p, _, _ = _im2col_nhwc(base_feat, 3, 3, 1, 1)                  # (L, 9C)

    # coordinate-major anchor layout: rows [c*A + a]
    anchors = generate_anchors(hf, wf, FEAT_STRIDE)                # (L*A, 4)
    anchorsT = anchors.reshape(L, A, 4).transpose(2, 1, 0).reshape(4 * A, L)

    wconvT = params["rpn_conv_w"].reshape(9 * C, C).T              # (C, 9C)
    # permute bbox-head columns anchor-major -> coordinate-major (dx*A, dy*A, ...)
    perm = jnp.array([4 * a + c for c in range(4) for a in range(A)], jnp.int32)
    whead = jnp.concatenate([params["rpn_cls_w"],
                             params["rpn_bbox_w"][:, perm]], axis=1)
    bhead = jnp.concatenate([params["rpn_cls_b"], params["rpn_bbox_b"][perm]])
    boxes_al, scores_al = rpn_fused(p.T, wconvT, params["rpn_conv_b"],
                                    whead.T, bhead, anchorsT, IM_H, IM_W)

    # proposal selection (anchor index = (h*W+w)*A + a, matching torch order)
    # TODO(synk): NMS has no clean Pallas equivalent; top-K on fg scores instead.
    scores_flat = scores_al.T.reshape(-1)                          # (L*A,)
    boxes_flat = boxes_al.reshape(4, A, L).transpose(2, 1, 0).reshape(-1, 4)
    _, order = jax.lax.top_k(scores_flat, NUM_ROIS)
    top_boxes = boxes_flat[order]
    rois = jnp.concatenate(
        [jnp.zeros((NUM_ROIS, 1), jnp.float32), top_boxes], axis=1)  # (R, 5)

    # ---------------- RCNN_roi_align ----------------
    wmat = roi_align_matrix(rois, hf, wf, POOL, 1.0 / FEAT_STRIDE)   # (R*P*P, L)
    feat_flat = base_feat[0].reshape(L, C)                           # (hw, C)
    pooled = pallas_matmul_bias(wmat, feat_flat,
                                jnp.zeros((C,), jnp.float32))        # (R*P*P, C)

    # ---------------- _head_to_tail + cls/bbox heads + softmax (one kernel) ----
    flat = pooled.reshape(NUM_ROIS, POOL * POOL * C)                 # contiguous
    head_w = jnp.concatenate([params["cls_w"], params["bbox_w"]], axis=1)
    head_b = jnp.concatenate([params["cls_b"], params["bbox_b"]])
    cls_prob, bbox_pred = tail_fused(flat, params["fc_w"], params["fc_b"],
                                     head_w, head_b)

    rois_out = rois.reshape(batch_size, NUM_ROIS, 5)
    cls_prob = cls_prob.reshape(batch_size, NUM_ROIS, -1)
    bbox_pred = bbox_pred.reshape(batch_size, NUM_ROIS, -1)

    # eval-mode: all losses are 0, rois_label is None (matches the torch branch)
    zero = 0.0
    return (rois_out, cls_prob, bbox_pred, zero, zero, zero, zero, None,
            zero, zero, zero, zero, zero)


if __name__ == "__main__":
    key = jax.random.PRNGKey(0)
    pkey, dkey = jax.random.split(key)
    params = init_params(pkey)

    im_data = jax.random.normal(dkey, (1, 3, IM_H, IM_W), jnp.float32)
    im_info = jnp.array([[float(IM_H), float(IM_W), 1.0]], jnp.float32)
    gt_boxes = jnp.zeros((1, 5, 5), jnp.float32)   # unused in eval forward
    num_boxes = jnp.zeros((1,), jnp.int32)

    fwd = jax.jit(faster_rcnn_forward)
    outs = fwd(params, im_data, im_info, gt_boxes, num_boxes)
    rois, cls_prob, bbox_pred = outs[0], outs[1], outs[2]
    jax.block_until_ready((rois, cls_prob, bbox_pred))
    assert rois.shape == (1, NUM_ROIS, 5)
    assert cls_prob.shape == (1, NUM_ROIS, N_CLASSES)
    assert bbox_pred.shape == (1, NUM_ROIS, 4 * N_CLASSES)
    assert bool(jnp.all(jnp.isfinite(cls_prob)))
    print("KERNEL_OK")
</pallas_src>

<mosaic_0001>
module attributes {stable_mosaic.version = 11 : i64} {
  func.func @_matmul_bias_kernel(%arg0: i32, %arg1: i32, %arg2: i32, %arg3: memref<256x128xf32, #tpu.memory_space<vmem>>, %arg4: memref<128x128xf32, #tpu.memory_space<vmem>>, %arg5: memref<1x128xf32, #tpu.memory_space<vmem>>, %arg6: memref<256x128xf32, #tpu.memory_space<vmem>>, %arg7: memref<256x128xf32, #tpu.memory_space<vmem>>) attributes {dimension_semantics = [#tpu.dimension_semantics<parallel>, #tpu.dimension_semantics<parallel>, #tpu.dimension_semantics<arbitrary>], iteration_bounds = array<i64: 1, 1, 1>, scalar_prefetch = 0 : i64, scratch_operands = 1 : i64, tpu.core_type = #tpu.core_type<tc>, window_params = [{transform_indices = @transform_0, window_bounds = array<i64: 256, 128>}, {transform_indices = @transform_1, window_bounds = array<i64: 128, 128>}, {transform_indices = @transform_2, window_bounds = array<i64: 1, 128>}, {transform_indices = @transform_3, window_bounds = array<i64: 256, 128>}]} {
    %c0_i32 = arith.constant 0 : i32
    %0 = arith.cmpi eq, %arg2, %c0_i32 : i32
    %1 = arith.extui %0 : i1 to i32
    %c0_i32_0 = arith.constant 0 : i32
    %2 = arith.cmpi ne, %1, %c0_i32_0 : i32
    scf.if %2 {
      %cst_10 = arith.constant 0.000000e+00 : f32
      %12 = vector.broadcast %cst_10 : f32 to vector<256x128xf32>
      %c0_11 = arith.constant 0 : index
      %c0_12 = arith.constant 0 : index
      %13 = vector.load %arg7[%c0_11, %c0_12] : memref<256x128xf32, #tpu.memory_space<vmem>>, vector<256x128xf32>
      tpu.vector_store %arg7[%c0_11, %c0_12], %12 {strides = array<i32>} : memref<256x128xf32, #tpu.memory_space<vmem>>, vector<256x128xf32>,
    } else {
    }
    %c0 = arith.constant 0 : index
    %c0_1 = arith.constant 0 : index
    %3 = vector.load %arg7[%c0, %c0_1] : memref<256x128xf32, #tpu.memory_space<vmem>>, vector<256x128xf32>
    %c0_2 = arith.constant 0 : index
    %c0_3 = arith.constant 0 : index
    %4 = vector.load %arg3[%c0_2, %c0_3] : memref<256x128xf32, #tpu.memory_space<vmem>>, vector<256x128xf32>
    %c0_4 = arith.constant 0 : index
    %c0_5 = arith.constant 0 : index
    %5 = vector.load %arg4[%c0_4, %c0_5] : memref<128x128xf32, #tpu.memory_space<vmem>>, vector<128x128xf32>
    %cst = arith.constant dense<0.000000e+00> : vector<256x128xf32>
    %6 = tpu.matmul %4, %5, %cst {dimension_numbers = #tpu.dot_dimension_numbers<[1], [0], [0], [1], [0, 0, 1, 1], [], []>} : vector<256x128xf32>, vector<128x128xf32>, vector<256x128xf32> -> vector<256x128xf32>
    %7 = arith.addf %3, %6 : vector<256x128xf32>
    %c0_6 = arith.constant 0 : index
    %c0_7 = arith.constant 0 : index
    %8 = vector.load %arg7[%c0_6, %c0_7] : memref<256x128xf32, #tpu.memory_space<vmem>>, vector<256x128xf32>
    tpu.vector_store %arg7[%c0_6, %c0_7], %7 {strides = array<i32>} : memref<256x128xf32, #tpu.memory_space<vmem>>, vector<256x128xf32>,
    %c0_i32_8 = arith.constant 0 : i32
    %9 = arith.cmpi eq, %arg2, %c0_i32_8 : i32
    %10 = arith.extui %9 : i1 to i32
    %c0_i32_9 = arith.constant 0 : i32
    %11 = arith.cmpi ne, %10, %c0_i32_9 : i32
    scf.if %11 {
      %c0_10 = arith.constant 0 : index
      %c0_11 = arith.constant 0 : index
      %12 = vector.load %arg7[%c0_10, %c0_11] : memref<256x128xf32, #tpu.memory_space<vmem>>, vector<256x128xf32>
      %c0_12 = arith.constant 0 : index
      %c0_13 = arith.constant 0 : index
      %13 = vector.load %arg5[%c0_12, %c0_13] : memref<1x128xf32, #tpu.memory_space<vmem>>, vector<1x128xf32>
      %14 = vector.broadcast %13 : vector<1x128xf32> to vector<256x128xf32>
      %15 = arith.addf %12, %14 : vector<256x128xf32>
      %cst_14 = arith.constant 0.000000e+00 : f32
      %16 = vector.broadcast %cst_14 : f32 to vector<256x128xf32>
      %17 = arith.maximumf %15, %16 : vector<256x128xf32>
      %c0_15 = arith.constant 0 : index
      %c0_16 = arith.constant 0 : index
      %18 = vector.load %arg6[%c0_15, %c0_16] : memref<256x128xf32, #tpu.memory_space<vmem>>, vector<256x128xf32>
      tpu.vector_store %arg6[%c0_15, %c0_16], %17 {strides = array<i32>} : memref<256x128xf32, #tpu.memory_space<vmem>>, vector<256x128xf32>,
    } else {
    }
    return
  }
  func.func @transform_0(%arg0: i32, %arg1: i32, %arg2: i32) -> (i32, i32) {
    %c0_i32 = arith.constant 0 : i32
    return %arg0, %arg2 : i32, i32
  }
  func.func @transform_1(%arg0: i32, %arg1: i32, %arg2: i32) -> (i32, i32) {
    %c0_i32 = arith.constant 0 : i32
    return %arg2, %arg1 : i32, i32
  }
  func.func @transform_2(%arg0: i32, %arg1: i32, %arg2: i32) -> (i32, i32) {
    %c0_i32 = arith.constant 0 : i32
    %c0_i32_0 = arith.constant 0 : i32
    return %c0_i32, %arg1 : i32, i32
  }
  func.func @transform_3(%arg0: i32, %arg1: i32, %arg2: i32) -> (i32, i32) {
    %c0_i32 = arith.constant 0 : i32
    return %arg0, %arg1 : i32, i32
  }
}

module attributes {stable_mosaic.version = 11 : i64} {
  func.func @_matmul_bias_kernel(%arg0: i32, %arg1: i32, %arg2: i32, %arg3: memref<64x128xf32, #tpu.memory_space<vmem>>, %arg4: memref<128x128xf32, #tpu.memory_space<vmem>>, %arg5: memref<1x128xf32, #tpu.memory_space<vmem>>, %arg6: memref<64x128xf32, #tpu.memory_space<vmem>>, %arg7: memref<64x128xf32, #tpu.memory_space<vmem>>) attributes {dimension_semantics = [#tpu.dimension_semantics<parallel>, #tpu.dimension_semantics<parallel>, #tpu.dimension_semantics<arbitrary>], iteration_bounds = array<i64: 1, 1, 1>, scalar_prefetch = 0 : i64, scratch_operands = 1 : i64, tpu.core_type = #tpu.core_type<tc>, window_params = [{transform_indices = @transform_0, window_bounds = array<i64: 64, 128>}, {transform_indices = @transform_1, window_bounds = array<i64: 128, 128>}, {transform_indices = @transform_2, window_bounds = array<i64: 1, 128>}, {transform_indices = @transform_3, window_bounds = array<i64: 64, 128>}]} {
    %c0_i32 = arith.constant 0 : i32
    %0 = arith.cmpi eq, %arg2, %c0_i32 : i32
    %1 = arith.extui %0 : i1 to i32
    %c0_i32_0 = arith.constant 0 : i32
    %2 = arith.cmpi ne, %1, %c0_i32_0 : i32
    scf.if %2 {
      %cst_10 = arith.constant 0.000000e+00 : f32
      %12 = vector.broadcast %cst_10 : f32 to vector<64x128xf32>
      %c0_11 = arith.constant 0 : index
      %c0_12 = arith.constant 0 : index
      %13 = vector.load %arg7[%c0_11, %c0_12] : memref<64x128xf32, #tpu.memory_space<vmem>>, vector<64x128xf32>
      tpu.vector_store %arg7[%c0_11, %c0_12], %12 {strides = array<i32>} : memref<64x128xf32, #tpu.memory_space<vmem>>, vector<64x128xf32>,
    } else {
    }
    %c0 = arith.constant 0 : index
    %c0_1 = arith.constant 0 : index
    %3 = vector.load %arg7[%c0, %c0_1] : memref<64x128xf32, #tpu.memory_space<vmem>>, vector<64x128xf32>
    %c0_2 = arith.constant 0 : index
    %c0_3 = arith.constant 0 : index
    %4 = vector.load %arg3[%c0_2, %c0_3] : memref<64x128xf32, #tpu.memory_space<vmem>>, vector<64x128xf32>
    %c0_4 = arith.constant 0 : index
    %c0_5 = arith.constant 0 : index
    %5 = vector.load %arg4[%c0_4, %c0_5] : memref<128x128xf32, #tpu.memory_space<vmem>>, vector<128x128xf32>
    %cst = arith.constant dense<0.000000e+00> : vector<64x128xf32>
    %6 = tpu.matmul %4, %5, %cst {dimension_numbers = #tpu.dot_dimension_numbers<[1], [0], [0], [1], [0, 0, 1, 1], [], []>} : vector<64x128xf32>, vector<128x128xf32>, vector<64x128xf32> -> vector<64x128xf32>
    %7 = arith.addf %3, %6 : vector<64x128xf32>
    %c0_6 = arith.constant 0 : index
    %c0_7 = arith.constant 0 : index
    %8 = vector.load %arg7[%c0_6, %c0_7] : memref<64x128xf32, #tpu.memory_space<vmem>>, vector<64x128xf32>
    tpu.vector_store %arg7[%c0_6, %c0_7], %7 {strides = array<i32>} : memref<64x128xf32, #tpu.memory_space<vmem>>, vector<64x128xf32>,
    %c0_i32_8 = arith.constant 0 : i32
    %9 = arith.cmpi eq, %arg2, %c0_i32_8 : i32
    %10 = arith.extui %9 : i1 to i32
    %c0_i32_9 = arith.constant 0 : i32
    %11 = arith.cmpi ne, %10, %c0_i32_9 : i32
    scf.if %11 {
      %c0_10 = arith.constant 0 : index
      %c0_11 = arith.constant 0 : index
      %12 = vector.load %arg7[%c0_10, %c0_11] : memref<64x128xf32, #tpu.memory_space<vmem>>, vector<64x128xf32>
      %c0_12 = arith.constant 0 : index
      %c0_13 = arith.constant 0 : index
      %13 = vector.load %arg5[%c0_12, %c0_13] : memref<1x128xf32, #tpu.memory_space<vmem>>, vector<1x128xf32>
      %14 = vector.broadcast %13 : vector<1x128xf32> to vector<64x128xf32>
      %15 = arith.addf %12, %14 : vector<64x128xf32>
      %cst_14 = arith.constant 0.000000e+00 : f32
      %16 = vector.broadcast %cst_14 : f32 to vector<64x128xf32>
      %17 = arith.maximumf %15, %16 : vector<64x128xf32>
      %c0_15 = arith.constant 0 : index
      %c0_16 = arith.constant 0 : index
      %18 = vector.load %arg6[%c0_15, %c0_16] : memref<64x128xf32, #tpu.memory_space<vmem>>, vector<64x128xf32>
      tpu.vector_store %arg6[%c0_15, %c0_16], %17 {strides = array<i32>} : memref<64x128xf32, #tpu.memory_space<vmem>>, vector<64x128xf32>,
    } else {
    }
    return
  }
  func.func @transform_0(%arg0: i32, %arg1: i32, %arg2: i32) -> (i32, i32) {
    %c0_i32 = arith.constant 0 : i32
    return %arg0, %arg2 : i32, i32
  }
  func.func @transform_1(%arg0: i32, %arg1: i32, %arg2: i32) -> (i32, i32) {
    %c0_i32 = arith.constant 0 : i32
    return %arg2, %arg1 : i32, i32
  }
  func.func @transform_2(%arg0: i32, %arg1: i32, %arg2: i32) -> (i32, i32) {
    %c0_i32 = arith.constant 0 : i32
    %c0_i32_0 = arith.constant 0 : i32
    return %c0_i32, %arg1 : i32, i32
  }
  func.func @transform_3(%arg0: i32, %arg1: i32, %arg2: i32) -> (i32, i32) {
    %c0_i32 = arith.constant 0 : i32
    return %arg0, %arg1 : i32, i32
  }
}

module attributes {stable_mosaic.version = 11 : i64} {
  func.func @_rpn_fused_kernel(%arg0: memref<144x64xf32, #tpu.memory_space<vmem>>, %arg1: memref<16x144xf32, #tpu.memory_space<vmem>>, %arg2: memref<16x1xf32, #tpu.memory_space<vmem>>, %arg3: memref<18x16xf32, #tpu.memory_space<vmem>>, %arg4: memref<18x1xf32, #tpu.memory_space<vmem>>, %arg5: memref<12x64xf32, #tpu.memory_space<vmem>>, %arg6: memref<12x64xf32, #tpu.memory_space<vmem>>, %arg7: memref<3x64xf32, #tpu.memory_space<vmem>>) attributes {dimension_semantics = [], scalar_prefetch = 0 : i64, scratch_operands = 0 : i64, tpu.core_type = #tpu.core_type<tc>} {
    %c0 = arith.constant 0 : index
    %c0_0 = arith.constant 0 : index
    %0 = vector.load %arg1[%c0, %c0_0] : memref<16x144xf32, #tpu.memory_space<vmem>>, vector<16x144xf32>
    %c0_1 = arith.constant 0 : index
    %c0_2 = arith.constant 0 : index
    %1 = vector.load %arg0[%c0_1, %c0_2] : memref<144x64xf32, #tpu.memory_space<vmem>>, vector<144x64xf32>
    %cst = arith.constant dense<0.000000e+00> : vector<16x64xf32>
    %2 = tpu.matmul %0, %1, %cst {dimension_numbers = #tpu.dot_dimension_numbers<[1], [0], [0], [1], [0, 0, 1, 1], [], []>} : vector<16x144xf32>, vector<144x64xf32>, vector<16x64xf32> -> vector<16x64xf32>
    %c0_3 = arith.constant 0 : index
    %c0_4 = arith.constant 0 : index
    %3 = vector.load %arg2[%c0_3, %c0_4] : memref<16x1xf32, #tpu.memory_space<vmem>>, vector<16x1xf32>
    %4 = vector.broadcast %3 : vector<16x1xf32> to vector<16x64xf32>
    %5 = arith.addf %2, %4 : vector<16x64xf32>
    %cst_5 = arith.constant 0.000000e+00 : f32
    %6 = vector.broadcast %cst_5 : f32 to vector<16x64xf32>
    %7 = arith.maximumf %5, %6 : vector<16x64xf32>
    %c0_6 = arith.constant 0 : index
    %c0_7 = arith.constant 0 : index
    %8 = vector.load %arg3[%c0_6, %c0_7] : memref<18x16xf32, #tpu.memory_space<vmem>>, vector<18x16xf32>
    %cst_8 = arith.constant dense<0.000000e+00> : vector<18x64xf32>
    %9 = tpu.matmul %8, %7, %cst_8 {dimension_numbers = #tpu.dot_dimension_numbers<[1], [0], [0], [1], [0, 0, 1, 1], [], []>} : vector<18x16xf32>, vector<16x64xf32>, vector<18x64xf32> -> vector<18x64xf32>
    %c0_9 = arith.constant 0 : index
    %c0_10 = arith.constant 0 : index
    %10 = vector.load %arg4[%c0_9, %c0_10] : memref<18x1xf32, #tpu.memory_space<vmem>>, vector<18x1xf32>
    %11 = vector.broadcast %10 : vector<18x1xf32> to vector<18x64xf32>
    %12 = arith.addf %9, %11 : vector<18x64xf32>
    %13 = vector.extract_strided_slice %12 {offsets = [0, 0], sizes = [3, 64], strides = [1, 1]} : vector<18x64xf32> to vector<3x64xf32>
    %14 = vector.extract_strided_slice %12 {offsets = [3, 0], sizes = [3, 64], strides = [1, 1]} : vector<18x64xf32> to vector<3x64xf32>
    %15 = arith.subf %14, %13 : vector<3x64xf32>
    %16 = arith.negf %15 : vector<3x64xf32>
    %17 = math.exp %16 : vector<3x64xf32>
    %cst_11 = arith.constant 1.000000e+00 : f32
    %18 = vector.broadcast %cst_11 : f32 to vector<3x64xf32>
    %19 = arith.addf %18, %17 : vector<3x64xf32>
    %20 = arith.divf %18, %19 : vector<3x64xf32>
    %c0_12 = arith.constant 0 : index
    %c0_13 = arith.constant 0 : index
    %21 = vector.load %arg7[%c0_12, %c0_13] : memref<3x64xf32, #tpu.memory_space<vmem>>, vector<3x64xf32>
    tpu.vector_store %arg7[%c0_12, %c0_13], %20 {strides = array<i32>} : memref<3x64xf32, #tpu.memory_space<vmem>>, vector<3x64xf32>,
    %c0_14 = arith.constant 0 : index
    %c0_15 = arith.constant 0 : index
    %22 = vector.load %arg5[%c0_14, %c0_15] : memref<12x64xf32, #tpu.memory_space<vmem>>, vector<3x64xf32>
    %c3 = arith.constant 3 : index
    %c0_16 = arith.constant 0 : index
    %23 = vector.load %arg5[%c3, %c0_16] : memref<12x64xf32, #tpu.memory_space<vmem>>, vector<3x64xf32>
    %c6 = arith.constant 6 : index
    %c0_17 = arith.constant 0 : index
    %24 = vector.load %arg5[%c6, %c0_17] : memref<12x64xf32, #tpu.memory_space<vmem>>, vector<3x64xf32>
    %c9 = arith.constant 9 : index
    %c0_18 = arith.constant 0 : index
    %25 = vector.load %arg5[%c9, %c0_18] : memref<12x64xf32, #tpu.memory_space<vmem>>, vector<3x64xf32>
    %26 = vector.extract_strided_slice %12 {offsets = [6, 0], sizes = [3, 64], strides = [1, 1]} : vector<18x64xf32> to vector<3x64xf32>
    %27 = vector.extract_strided_slice %12 {offsets = [9, 0], sizes = [3, 64], strides = [1, 1]} : vector<18x64xf32> to vector<3x64xf32>
    %28 = vector.extract_strided_slice %12 {offsets = [12, 0], sizes = [3, 64], strides = [1, 1]} : vector<18x64xf32> to vector<3x64xf32>
    %cst_19 = arith.constant 4.13516665 : f32
    %29 = vector.broadcast %cst_19 : f32 to vector<3x64xf32>
    %30 = arith.minimumf %28, %29 : vector<3x64xf32>
    %31 = vector.extract_strided_slice %12 {offsets = [15, 0], sizes = [3, 64], strides = [1, 1]} : vector<18x64xf32> to vector<3x64xf32>
    %cst_20 = arith.constant 4.13516665 : f32
    %32 = vector.broadcast %cst_20 : f32 to vector<3x64xf32>
    %33 = arith.minimumf %31, %32 : vector<3x64xf32>
    %34 = arith.subf %24, %22 : vector<3x64xf32>
    %cst_21 = arith.constant 1.000000e+00 : f32
    %35 = vector.broadcast %cst_21 : f32 to vector<3x64xf32>
    %36 = arith.addf %34, %35 : vector<3x64xf32>
    %37 = arith.subf %25, %23 : vector<3x64xf32>
    %cst_22 = arith.constant 1.000000e+00 : f32
    %38 = vector.broadcast %cst_22 : f32 to vector<3x64xf32>
    %39 = arith.addf %37, %38 : vector<3x64xf32>
    %cst_23 = arith.constant 5.000000e-01 : f32
    %40 = vector.broadcast %cst_23 : f32 to vector<3x64xf32>
    %41 = arith.mulf %40, %36 : vector<3x64xf32>
    %42 = arith.addf %22, %41 : vector<3x64xf32>
    %cst_24 = arith.constant 5.000000e-01 : f32
    %43 = vector.broadcast %cst_24 : f32 to vector<3x64xf32>
    %44 = arith.mulf %43, %39 : vector<3x64xf32>
    %45 = arith.addf %23, %44 : vector<3x64xf32>
    %46 = arith.mulf %26, %36 : vector<3x64xf32>
    %47 = arith.addf %46, %42 : vector<3x64xf32>
    %48 = arith.mulf %27, %39 : vector<3x64xf32>
    %49 = arith.addf %48, %45 : vector<3x64xf32>
    %50 = math.exp %30 : vector<3x64xf32>
    %51 = arith.mulf %50, %36 : vector<3x64xf32>
    %52 = math.exp %33 : vector<3x64xf32>
    %53 = arith.mulf %52, %39 : vector<3x64xf32>
    %cst_25 = arith.constant 5.000000e-01 : f32
    %54 = vector.broadcast %cst_25 : f32 to vector<3x64xf32>
    %55 = arith.mulf %54, %51 : vector<3x64xf32>
    %56 = arith.subf %47, %55 : vector<3x64xf32>
    %cst_26 = arith.constant 0.000000e+00 : f32
    %cst_27 = arith.constant 3.100000e+01 : f32
    %57 = vector.broadcast %cst_26 : f32 to vector<3x64xf32>
    %58 = arith.maximumf %57, %56 : vector<3x64xf32>
    %59 = vector.broadcast %cst_27 : f32 to vector<3x64xf32>
    %60 = arith.minimumf %59, %58 : vector<3x64xf32>
    %c0_28 = arith.constant 0 : index
    %c0_29 = arith.constant 0 : index
    %61 = vector.load %arg6[%c0_28, %c0_29] : memref<12x64xf32, #tpu.memory_space<vmem>>, vector<3x64xf32>
    tpu.vector_store %arg6[%c0_28, %c0_29], %60 {strides = array<i32>} : memref<12x64xf32, #tpu.memory_space<vmem>>, vector<3x64xf32>,
    %cst_30 = arith.constant 5.000000e-01 : f32
    %62 = vector.broadcast %cst_30 : f32 to vector<3x64xf32>
    %63 = arith.mulf %62, %53 : vector<3x64xf32>
    %64 = arith.subf %49, %63 : vector<3x64xf32>
    %cst_31 = arith.constant 0.000000e+00 : f32
    %cst_32 = arith.constant 3.100000e+01 : f32
    %65 = vector.broadcast %cst_31 : f32 to vector<3x64xf32>
    %66 = arith.maximumf %65, %64 : vector<3x64xf32>
    %67 = vector.broadcast %cst_32 : f32 to vector<3x64xf32>
    %68 = arith.minimumf %67, %66 : vector<3x64xf32>
    %c3_33 = arith.constant 3 : index
    %c0_34 = arith.constant 0 : index
    %69 = vector.load %arg6[%c3_33, %c0_34] : memref<12x64xf32, #tpu.memory_space<vmem>>, vector<3x64xf32>
    tpu.vector_store %arg6[%c3_33, %c0_34], %68 {strides = array<i32>} : memref<12x64xf32, #tpu.memory_space<vmem>>, vector<3x64xf32>,
    %cst_35 = arith.constant 5.000000e-01 : f32
    %70 = vector.broadcast %cst_35 : f32 to vector<3x64xf32>
    %71 = arith.mulf %70, %51 : vector<3x64xf32>
    %72 = arith.addf %47, %71 : vector<3x64xf32>
    %cst_36 = arith.constant 0.000000e+00 : f32
    %cst_37 = arith.constant 3.100000e+01 : f32
    %73 = vector.broadcast %cst_36 : f32 to vector<3x64xf32>
    %74 = arith.maximumf %73, %72 : vector<3x64xf32>
    %75 = vector.broadcast %cst_37 : f32 to vector<3x64xf32>
    %76 = arith.minimumf %75, %74 : vector<3x64xf32>
    %c6_38 = arith.constant 6 : index
    %c0_39 = arith.constant 0 : index
    %77 = vector.load %arg6[%c6_38, %c0_39] : memref<12x64xf32, #tpu.memory_space<vmem>>, vector<3x64xf32>
    tpu.vector_store %arg6[%c6_38, %c0_39], %76 {strides = array<i32>} : memref<12x64xf32, #tpu.memory_space<vmem>>, vector<3x64xf32>,
    %cst_40 = arith.constant 5.000000e-01 : f32
    %78 = vector.broadcast %cst_40 : f32 to vector<3x64xf32>
    %79 = arith.mulf %78, %53 : vector<3x64xf32>
    %80 = arith.addf %49, %79 : vector<3x64xf32>
    %cst_41 = arith.constant 0.000000e+00 : f32
    %cst_42 = arith.constant 3.100000e+01 : f32
    %81 = vector.broadcast %cst_41 : f32 to vector<3x64xf32>
    %82 = arith.maximumf %81, %80 : vector<3x64xf32>
    %83 = vector.broadcast %cst_42 : f32 to vector<3x64xf32>
    %84 = arith.minimumf %83, %82 : vector<3x64xf32>
    %c9_43 = arith.constant 9 : index
    %c0_44 = arith.constant 0 : index
    %85 = vector.load %arg6[%c9_43, %c0_44] : memref<12x64xf32, #tpu.memory_space<vmem>>, vector<3x64xf32>
    tpu.vector_store %arg6[%c9_43, %c0_44], %84 {strides = array<i32>} : memref<12x64xf32, #tpu.memory_space<vmem>>, vector<3x64xf32>,
    return
  }
}

module attributes {stable_mosaic.version = 11 : i64} {
  func.func @_matmul_bias_kernel(%arg0: i32, %arg1: i32, %arg2: i32, %arg3: memref<128x128xf32, #tpu.memory_space<vmem>>, %arg4: memref<128x128xf32, #tpu.memory_space<vmem>>, %arg5: memref<1x128xf32, #tpu.memory_space<vmem>>, %arg6: memref<128x128xf32, #tpu.memory_space<vmem>>, %arg7: memref<128x128xf32, #tpu.memory_space<vmem>>) attributes {dimension_semantics = [#tpu.dimension_semantics<parallel>, #tpu.dimension_semantics<parallel>, #tpu.dimension_semantics<arbitrary>], iteration_bounds = array<i64: 1, 1, 1>, scalar_prefetch = 0 : i64, scratch_operands = 1 : i64, tpu.core_type = #tpu.core_type<tc>, window_params = [{transform_indices = @transform_0, window_bounds = array<i64: 128, 128>}, {transform_indices = @transform_1, window_bounds = array<i64: 128, 128>}, {transform_indices = @transform_2, window_bounds = array<i64: 1, 128>}, {transform_indices = @transform_3, window_bounds = array<i64: 128, 128>}]} {
    %c0_i32 = arith.constant 0 : i32
    %0 = arith.cmpi eq, %arg2, %c0_i32 : i32
    %1 = arith.extui %0 : i1 to i32
    %c0_i32_0 = arith.constant 0 : i32
    %2 = arith.cmpi ne, %1, %c0_i32_0 : i32
    scf.if %2 {
      %cst_10 = arith.constant 0.000000e+00 : f32
      %12 = vector.broadcast %cst_10 : f32 to vector<128x128xf32>
      %c0_11 = arith.constant 0 : index
      %c0_12 = arith.constant 0 : index
      %13 = vector.load %arg7[%c0_11, %c0_12] : memref<128x128xf32, #tpu.memory_space<vmem>>, vector<128x128xf32>
      tpu.vector_store %arg7[%c0_11, %c0_12], %12 {strides = array<i32>} : memref<128x128xf32, #tpu.memory_space<vmem>>, vector<128x128xf32>,
    } else {
    }
    %c0 = arith.constant 0 : index
    %c0_1 = arith.constant 0 : index
    %3 = vector.load %arg7[%c0, %c0_1] : memref<128x128xf32, #tpu.memory_space<vmem>>, vector<128x128xf32>
    %c0_2 = arith.constant 0 : index
    %c0_3 = arith.constant 0 : index
    %4 = vector.load %arg3[%c0_2, %c0_3] : memref<128x128xf32, #tpu.memory_space<vmem>>, vector<128x128xf32>
    %c0_4 = arith.constant 0 : index
    %c0_5 = arith.constant 0 : index
    %5 = vector.load %arg4[%c0_4, %c0_5] : memref<128x128xf32, #tpu.memory_space<vmem>>, vector<128x128xf32>
    %cst = arith.constant dense<0.000000e+00> : vector<128x128xf32>
    %6 = tpu.matmul %4, %5, %cst {dimension_numbers = #tpu.dot_dimension_numbers<[1], [0], [0], [1], [0, 0, 1, 1], [], []>} : vector<128x128xf32>, vector<128x128xf32>, vector<128x128xf32> -> vector<128x128xf32>
    %7 = arith.addf %3, %6 : vector<128x128xf32>
    %c0_6 = arith.constant 0 : index
    %c0_7 = arith.constant 0 : index
    %8 = vector.load %arg7[%c0_6, %c0_7] : memref<128x128xf32, #tpu.memory_space<vmem>>, vector<128x128xf32>
    tpu.vector_store %arg7[%c0_6, %c0_7], %7 {strides = array<i32>} : memref<128x128xf32, #tpu.memory_space<vmem>>, vector<128x128xf32>,
    %c0_i32_8 = arith.constant 0 : i32
    %9 = arith.cmpi eq, %arg2, %c0_i32_8 : i32
    %10 = arith.extui %9 : i1 to i32
    %c0_i32_9 = arith.constant 0 : i32
    %11 = arith.cmpi ne, %10, %c0_i32_9 : i32
    scf.if %11 {
      %c0_10 = arith.constant 0 : index
      %c0_11 = arith.constant 0 : index
      %12 = vector.load %arg7[%c0_10, %c0_11] : memref<128x128xf32, #tpu.memory_space<vmem>>, vector<128x128xf32>
      %c0_12 = arith.constant 0 : index
      %c0_13 = arith.constant 0 : index
      %13 = vector.load %arg5[%c0_12, %c0_13] : memref<1x128xf32, #tpu.memory_space<vmem>>, vector<1x128xf32>
      %14 = vector.broadcast %13 : vector<1x128xf32> to vector<128x128xf32>
      %15 = arith.addf %12, %14 : vector<128x128xf32>
      %c0_14 = arith.constant 0 : index
      %c0_15 = arith.constant 0 : index
      %16 = vector.load %arg6[%c0_14, %c0_15] : memref<128x128xf32, #tpu.memory_space<vmem>>, vector<128x128xf32>
      tpu.vector_store %arg6[%c0_14, %c0_15], %15 {strides = array<i32>} : memref<128x128xf32, #tpu.memory_space<vmem>>, vector<128x128xf32>,
    } else {
    }
    return
  }
  func.func @transform_0(%arg0: i32, %arg1: i32, %arg2: i32) -> (i32, i32) {
    %c0_i32 = arith.constant 0 : i32
    return %arg0, %arg2 : i32, i32
  }
  func.func @transform_1(%arg0: i32, %arg1: i32, %arg2: i32) -> (i32, i32) {
    %c0_i32 = arith.constant 0 : i32
    return %arg2, %arg1 : i32, i32
  }
  func.func @transform_2(%arg0: i32, %arg1: i32, %arg2: i32) -> (i32, i32) {
    %c0_i32 = arith.constant 0 : i32
    %c0_i32_0 = arith.constant 0 : i32
    return %c0_i32, %arg1 : i32, i32
  }
  func.func @transform_3(%arg0: i32, %arg1: i32, %arg2: i32) -> (i32, i32) {
    %c0_i32 = arith.constant 0 : i32
    return %arg0, %arg1 : i32, i32
  }
}

module attributes {stable_mosaic.version = 11 : i64} {
  func.func @_tail_fused_kernel(%arg0: memref<8x256xf32, #tpu.memory_space<vmem>>, %arg1: memref<256x32xf32, #tpu.memory_space<vmem>>, %arg2: memref<1x32xf32, #tpu.memory_space<vmem>>, %arg3: memref<32x20xf32, #tpu.memory_space<vmem>>, %arg4: memref<1x20xf32, #tpu.memory_space<vmem>>, %arg5: memref<8x4xf32, #tpu.memory_space<vmem>>, %arg6: memref<8x16xf32, #tpu.memory_space<vmem>>) attributes {dimension_semantics = [], scalar_prefetch = 0 : i64, scratch_operands = 0 : i64, tpu.core_type = #tpu.core_type<tc>} {
    %c0 = arith.constant 0 : index
    %c0_0 = arith.constant 0 : index
    %0 = vector.load %arg0[%c0, %c0_0] : memref<8x256xf32, #tpu.memory_space<vmem>>, vector<8x256xf32>
    %c0_1 = arith.constant 0 : index
    %c0_2 = arith.constant 0 : index
    %1 = vector.load %arg1[%c0_1, %c0_2] : memref<256x32xf32, #tpu.memory_space<vmem>>, vector<256x32xf32>
    %cst = arith.constant dense<0.000000e+00> : vector<8x32xf32>
    %2 = tpu.matmul %0, %1, %cst {dimension_numbers = #tpu.dot_dimension_numbers<[1], [0], [0], [1], [0, 0, 1, 1], [], []>} : vector<8x256xf32>, vector<256x32xf32>, vector<8x32xf32> -> vector<8x32xf32>
    %c0_3 = arith.constant 0 : index
    %c0_4 = arith.constant 0 : index
    %3 = vector.load %arg2[%c0_3, %c0_4] : memref<1x32xf32, #tpu.memory_space<vmem>>, vector<1x32xf32>
    %4 = vector.broadcast %3 : vector<1x32xf32> to vector<8x32xf32>
    %5 = arith.addf %2, %4 : vector<8x32xf32>
    %cst_5 = arith.constant 0.000000e+00 : f32
    %6 = vector.broadcast %cst_5 : f32 to vector<8x32xf32>
    %7 = arith.maximumf %5, %6 : vector<8x32xf32>
    %c0_6 = arith.constant 0 : index
    %c0_7 = arith.constant 0 : index
    %8 = vector.load %arg3[%c0_6, %c0_7] : memref<32x20xf32, #tpu.memory_space<vmem>>, vector<32x20xf32>
    %cst_8 = arith.constant dense<0.000000e+00> : vector<8x20xf32>
    %9 = tpu.matmul %7, %8, %cst_8 {dimension_numbers = #tpu.dot_dimension_numbers<[1], [0], [0], [1], [0, 0, 1, 1], [], []>} : vector<8x32xf32>, vector<32x20xf32>, vector<8x20xf32> -> vector<8x20xf32>
    %c0_9 = arith.constant 0 : index
    %c0_10 = arith.constant 0 : index
    %10 = vector.load %arg4[%c0_9, %c0_10] : memref<1x20xf32, #tpu.memory_space<vmem>>, vector<1x20xf32>
    %11 = vector.broadcast %10 : vector<1x20xf32> to vector<8x20xf32>
    %12 = arith.addf %9, %11 : vector<8x20xf32>
    %13 = vector.extract_strided_slice %12 {offsets = [0, 0], sizes = [8, 4], strides = [1, 1]} : vector<8x20xf32> to vector<8x4xf32>
    %cst_11 = arith.constant dense<0xFF800000> : vector<8xf32>
    %14 = vector.multi_reduction <maximumf>, %13, %cst_11 [1] : vector<8x4xf32> to vector<8xf32>
    %15 = vector.shape_cast %14 : vector<8xf32> to vector<8x1xf32>
    %16 = vector.broadcast %15 : vector<8x1xf32> to vector<8x4xf32>
    %17 = arith.subf %13, %16 : vector<8x4xf32>
    %18 = math.exp %17 : vector<8x4xf32>
    %cst_12 = arith.constant dense<0.000000e+00> : vector<8xf32>
    %19 = vector.multi_reduction <add>, %18, %cst_12 [1] : vector<8x4xf32> to vector<8xf32>
    %20 = vector.shape_cast %19 : vector<8xf32> to vector<8x1xf32>
    %21 = vector.broadcast %20 : vector<8x1xf32> to vector<8x4xf32>
    %22 = arith.divf %18, %21 : vector<8x4xf32>
    %c0_13 = arith.constant 0 : index
    %c0_14 = arith.constant 0 : index
    %23 = vector.load %arg5[%c0_13, %c0_14] : memref<8x4xf32, #tpu.memory_space<vmem>>, vector<8x4xf32>
    tpu.vector_store %arg5[%c0_13, %c0_14], %22 {strides = array<i32>} : memref<8x4xf32, #tpu.memory_space<vmem>>, vector<8x4xf32>,
    %24 = vector.extract_strided_slice %12 {offsets = [0, 4], sizes = [8, 16], strides = [1, 1]} : vector<8x20xf32> to vector<8x16xf32>
    %c0_15 = arith.constant 0 : index
    %c0_16 = arith.constant 0 : index
    %25 = vector.load %arg6[%c0_15, %c0_16] : memref<8x16xf32, #tpu.memory_space<vmem>>, vector<8x16xf32>
    tpu.vector_store %arg6[%c0_15, %c0_16], %24 {strides = array<i32>} : memref<8x16xf32, #tpu.memory_space<vmem>>, vector<8x16xf32>,
    return
  }
}

</mosaic_0001>

<llo_original>
// kernel: faster_rcnn_forward.5
$region0: #{faster_rcnn_forward.5}
  #allocation0 [shape = 'u32[]', space=smem, size = 0x4, offset = 0x4, fixed_abs, tag = 'smem constant byte address 0x4 - core index']
  #allocation1 [shape = 'u32[72,128]{1,0:T(1,128)}', space=vmem, size = 0x9000, scoped, tag = 'internal scratch']
  #allocation2 [shape = 'f32[256,128]{1,0:T(8,128)}', space=vmem, size = 0x20000, scoped, tag = 'scratch operand']
  %s0 = inlined_call_operand.vmem [shape: f32[256,128], index: 0, kind: input, shape index: {}]
  %s1 = inlined_call_operand.vmem [shape: f32[128,128], index: 1, kind: input, shape index: {}]
  %s2 = inlined_call_operand.vmem [shape: f32[1,128], index: 2, kind: input, shape index: {}]
  %s3 = inlined_call_operand.vmem [shape: f32[256,128], index: 3, kind: output, shape index: {}]
  %s4 = sld [smem:[#allocation0]]
  $region30: #{faster_rcnn_forward.5} parent=0
    _
  %s6 = ssub.s32 1, %s4
  %s7 = scalar_select 0, %s6, %s4
  // Predicated region
  $region2: #{faster_rcnn_forward.5} parent=0 // pred_check
    _
  $region3: #{faster_rcnn_forward.5} parent=0 // pred_check_branch
    %9 = sbr.rel (0) target = $region5
  $region4: #{faster_rcnn_forward.5} parent=0 // pred_region
    _
  $region5: #{faster_rcnn_forward.5} parent=0 // pred_fallthru
    _
  // Predicated region
  $region6: #{faster_rcnn_forward.5} parent=0 // pred_check
    _
  $region7: #{faster_rcnn_forward.5} parent=0 // pred_check_branch
    %11 = sbr.rel (0) target = $region9
  $region8: #{faster_rcnn_forward.5} parent=0 // pred_region
    _
  $region9: #{faster_rcnn_forward.5} parent=0 // pred_fallthru
    _
  // Predicated region
  $region10: #{faster_rcnn_forward.5} parent=0 // pred_check
    _
  $region11: #{faster_rcnn_forward.5} parent=0 // pred_check_branch
    %13 = sbr.rel (0) target = $region13
  $region12: #{faster_rcnn_forward.5} parent=0 // pred_region
    _
  $region13: #{faster_rcnn_forward.5} parent=0 // pred_fallthru
    _
  %p14 = scmp.eq.s32.totalorder 0, 0
  // Predicated region
  $region14: #{faster_rcnn_forward.5} parent=0 // pred_check
    %p15 = pneg %p14
  $region15: #{faster_rcnn_forward.5} parent=0 // pred_check_branch
    %17 = sbr.rel (%p15) target = $region17
  $region16: #{faster_rcnn_forward.5} parent=0 // pred_region
    %18 = vst [vmem:[#allocation2] sm:$0xff] 0.0
    %19 = vst [vmem:[#allocation2 + $0x8] sm:$0xff] 0.0
    %20 = vst [vmem:[#allocation2 + $0x10] sm:$0xff] 0.0
    %21 = vst [vmem:[#allocation2 + $0x18] sm:$0xff] 0.0
    %22 = vst [vmem:[#allocation2 + $0x20] sm:$0xff] 0.0
    %23 = vst [vmem:[#allocation2 + $0x28] sm:$0xff] 0.0
    %24 = vst [vmem:[#allocation2 + $0x30] sm:$0xff] 0.0
    %25 = vst [vmem:[#allocation2 + $0x38] sm:$0xff] 0.0
    %26 = vst [vmem:[#allocation2 + $0x40] sm:$0xff] 0.0
    %27 = vst [vmem:[#allocation2 + $0x48] sm:$0xff] 0.0
    %28 = vst [vmem:[#allocation2 + $0x50] sm:$0xff] 0.0
    %29 = vst [vmem:[#allocation2 + $0x58] sm:$0xff] 0.0
    %30 = vst [vmem:[#allocation2 + $0x60] sm:$0xff] 0.0
    %31 = vst [vmem:[#allocation2 + $0x68] sm:$0xff] 0.0
    %32 = vst [vmem:[#allocation2 + $0x70] sm:$0xff] 0.0
    %33 = vst [vmem:[#allocation2 + $0x78] sm:$0xff] 0.0
    %34 = vst [vmem:[#allocation2 + $0x80] sm:$0xff] 0.0
    %35 = vst [vmem:[#allocation2 + $0x88] sm:$0xff] 0.0
    %36 = vst [vmem:[#allocation2 + $0x90] sm:$0xff] 0.0
    %37 = vst [vmem:[#allocation2 + $0x98] sm:$0xff] 0.0
    %38 = vst [vmem:[#allocation2 + $0xa0] sm:$0xff] 0.0
    %39 = vst [vmem:[#allocation2 + $0xa8] sm:$0xff] 0.0
    %40 = vst [vmem:[#allocation2 + $0xb0] sm:$0xff] 0.0
    %41 = vst [vmem:[#allocation2 + $0xb8] sm:$0xff] 0.0
    %42 = vst [vmem:[#allocation2 + $0xc0] sm:$0xff] 0.0
    %43 = vst [vmem:[#allocation2 + $0xc8] sm:$0xff] 0.0
    %44 = vst [vmem:[#allocation2 + $0xd0] sm:$0xff] 0.0
    %45 = vst [vmem:[#allocation2 + $0xd8] sm:$0xff] 0.0
    %46 = vst [vmem:[#allocation2 + $0xe0] sm:$0xff] 0.0
    %47 = vst [vmem:[#allocation2 + $0xe8] sm:$0xff] 0.0
    %48 = vst [vmem:[#allocation2 + $0xf0] sm:$0xff] 0.0
    %49 = vst [vmem:[#allocation2 + $0xf8] sm:$0xff] 0.0
  $region17: #{faster_rcnn_forward.5} parent=0 // pred_fallthru
    _
  %v50 = vld [vmem:[#allocation2] sm:$0xff]
  %v51 = vld [vmem:[#allocation2 + $0x8] sm:$0xff]
  %v52 = vld [vmem:[#allocation2 + $0x10] sm:$0xff]
  %v53 = vld [vmem:[#allocation2 + $0x18] sm:$0xff]
  %v54 = vld [vmem:[#allocation2 + $0x20] sm:$0xff]
  %v55 = vld [vmem:[#allocation2 + $0x28] sm:$0xff]
  %v56 = vld [vmem:[#allocation2 + $0x30] sm:$0xff]
  %v57 = vld [vmem:[#allocation2 + $0x38] sm:$0xff]
  %v58 = vld [vmem:[#allocation2 + $0x40] sm:$0xff]
  %v59 = vld [vmem:[#allocation2 + $0x48] sm:$0xff]
  %v60 = vld [vmem:[#allocation2 + $0x50] sm:$0xff]
  %v61 = vld [vmem:[#allocation2 + $0x58] sm:$0xff]
  %v62 = vld [vmem:[#allocation2 + $0x60] sm:$0xff]
  %v63 = vld [vmem:[#allocation2 + $0x68] sm:$0xff]
  %v64 = vld [vmem:[#allocation2 + $0x70] sm:$0xff]
  %v65 = vld [vmem:[#allocation2 + $0x78] sm:$0xff]
  %v66 = vld [vmem:[#allocation2 + $0x80] sm:$0xff]
  %v67 = vld [vmem:[#allocation2 + $0x88] sm:$0xff]
  %v68 = vld [vmem:[#allocation2 + $0x90] sm:$0xff]
  %v69 = vld [vmem:[#allocation2 + $0x98] sm:$0xff]
  %v70 = vld [vmem:[#allocation2 + $0xa0] sm:$0xff]
  %v71 = vld [vmem:[#allocation2 + $0xa8] sm:$0xff]
  %v72 = vld [vmem:[#allocation2 + $0xb0] sm:$0xff]
  %v73 = vld [vmem:[#allocation2 + $0xb8] sm:$0xff]
  %v74 = vld [vmem:[#allocation2 + $0xc0] sm:$0xff]
  %v75 = vld [vmem:[#allocation2 + $0xc8] sm:$0xff]
  %v76 = vld [vmem:[#allocation2 + $0xd0] sm:$0xff]
  %v77 = vld [vmem:[#allocation2 + $0xd8] sm:$0xff]
  %v78 = vld [vmem:[#allocation2 + $0xe0] sm:$0xff]
  %v79 = vld [vmem:[#allocation2 + $0xe8] sm:$0xff]
  %v80 = vld [vmem:[#allocation2 + $0xf0] sm:$0xff]
  %v81 = vld [vmem:[#allocation2 + $0xf8] sm:$0xff]
  %v82 = vld [vmem:[%s0] sm:$0xff]
  %v83 = vld [vmem:[%s0 + $0x8] sm:$0xff]
  %v84 = vld [vmem:[%s0 + $0x10] sm:$0xff]
  %v85 = vld [vmem:[%s0 + $0x18] sm:$0xff]
  %v86 = vld [vmem:[%s0 + $0x20] sm:$0xff]
  %v87 = vld [vmem:[%s0 + $0x28] sm:$0xff]
  %v88 = vld [vmem:[%s0 + $0x30] sm:$0xff]
  %v89 = vld [vmem:[%s0 + $0x38] sm:$0xff]
  %v90 = vld [vmem:[%s0 + $0x40] sm:$0xff]
  %v91 = vld [vmem:[%s0 + $0x48] sm:$0xff]
  %v92 = vld [vmem:[%s0 + $0x50] sm:$0xff]
  %v93 = vld [vmem:[%s0 + $0x58] sm:$0xff]
  %v94 = vld [vmem:[%s0 + $0x60] sm:$0xff]
  %v95 = vld [vmem:[%s0 + $0x68] sm:$0xff]
  %v96 = vld [vmem:[%s0 + $0x70] sm:$0xff]
  %v97 = vld [vmem:[%s0 + $0x78] sm:$0xff]
  %v98 = vld [vmem:[%s0 + $0x80] sm:$0xff]
  %v99 = vld [vmem:[%s0 + $0x88] sm:$0xff]
  %v100 = vld [vmem:[%s0 + $0x90] sm:$0xff]
  %v101 = vld [vmem:[%s0 + $0x98] sm:$0xff]
  %v102 = vld [vmem:[%s0 + $0xa0] sm:$0xff]
  %v103 = vld [vmem:[%s0 + $0xa8] sm:$0xff]
  %v104 = vld [vmem:[%s0 + $0xb0] sm:$0xff]
  %v105 = vld [vmem:[%s0 + $0xb8] sm:$0xff]
  %v106 = vld [vmem:[%s0 + $0xc0] sm:$0xff]
  %v107 = vld [vmem:[%s0 + $0xc8] sm:$0xff]
  %v108 = vld [vmem:[%s0 + $0xd0] sm:$0xff]
  %v109 = vld [vmem:[%s0 + $0xd8] sm:$0xff]
  %v110 = vld [vmem:[%s0 + $0xe0] sm:$0xff]
  %v111 = vld [vmem:[%s0 + $0xe8] sm:$0xff]
  %v112 = vld [vmem:[%s0 + $0xf0] sm:$0xff]
  %v113 = vld [vmem:[%s0 + $0xf8] sm:$0xff]
  %v114 = vld [vmem:[%s1] sm:$0xff]
  %v115 = vld [vmem:[%s1 + $0x8] sm:$0xff]
  %v116 = vld [vmem:[%s1 + $0x10] sm:$0xff]
  %v117 = vld [vmem:[%s1 + $0x18] sm:$0xff]
  %v118 = vld [vmem:[%s1 + $0x20] sm:$0xff]
  %v119 = vld [vmem:[%s1 + $0x28] sm:$0xff]
  %v120 = vld [vmem:[%s1 + $0x30] sm:$0xff]
  %v121 = vld [vmem:[%s1 + $0x38] sm:$0xff]
  %v122 = vld [vmem:[%s1 + $0x40] sm:$0xff]
  %v123 = vld [vmem:[%s1 + $0x48] sm:$0xff]
  %v124 = vld [vmem:[%s1 + $0x50] sm:$0xff]
  %v125 = vld [vmem:[%s1 + $0x58] sm:$0xff]
  %v126 = vld [vmem:[%s1 + $0x60] sm:$0xff]
  %v127 = vld [vmem:[%s1 + $0x68] sm:$0xff]
  %v128 = vld [vmem:[%s1 + $0x70] sm:$0xff]
  %v129 = vld [vmem:[%s1 + $0x78] sm:$0xff]
  %130 = vmatpush.msra.mxu0 %v129
  %131 = vmatpush.msra.mxu0 %v128
  %132 = vmatpush.msra.mxu0 %v127
  %133 = vmatpush.msra.mxu0 %v126
  %134 = vmatpush.msra.mxu0 %v125
  %135 = vmatpush.msra.mxu0 %v124
  %136 = vmatpush.msra.mxu0 %v123
  %137 = vmatpush.msra.mxu0 %v122
  %138 = vmatpush.msra.mxu0 %v121
  %139 = vmatpush.msra.mxu0 %v120
  %140 = vmatpush.msra.mxu0 %v119
  %141 = vmatpush.msra.mxu0 %v118
  %142 = vmatpush.msra.mxu0 %v117
  %143 = vmatpush.msra.mxu0 %v116
  %144 = vmatpush.msra.mxu0 %v115
  %145 = vmatpush.msra.mxu0 %v114
  %146 = vmatmul.f32.gmra.mxu0 %v82
  %v147 = vpop.f32.mrf.mxu0
  %v148 = vadd.f32 0.0, %v147
  %149 = vmatmul.f32.gmra.mxu0 %v83
  %v150 = vpop.f32.mrf.mxu0
  %v151 = vadd.f32 0.0, %v150
  %152 = vmatmul.f32.gmra.mxu0 %v84
  %v153 = vpop.f32.mrf.mxu0
  %v154 = vadd.f32 0.0, %v153
  %155 = vmatmul.f32.gmra.mxu0 %v85
  %v156 = vpop.f32.mrf.mxu0
  %v157 = vadd.f32 0.0, %v156
  %158 = vmatmul.f32.gmra.mxu0 %v86
  %v159 = vpop.f32.mrf.mxu0
  %v160 = vadd.f32 0.0, %v159
  %161 = vmatmul.f32.gmra.mxu0 %v87
  %v162 = vpop.f32.mrf.mxu0
  %v163 = vadd.f32 0.0, %v162
  %164 = vmatmul.f32.gmra.mxu0 %v88
  %v165 = vpop.f32.mrf.mxu0
  %v166 = vadd.f32 0.0, %v165
  %167 = vmatmul.f32.gmra.mxu0 %v89
  %v168 = vpop.f32.mrf.mxu0
  %v169 = vadd.f32 0.0, %v168
  %170 = vmatmul.f32.gmra.mxu0 %v90
  %v171 = vpop.f32.mrf.mxu0
  %v172 = vadd.f32 0.0, %v171
  %173 = vmatmul.f32.gmra.mxu0 %v91
  %v174 = vpop.f32.mrf.mxu0
  %v175 = vadd.f32 0.0, %v174
  %176 = vmatmul.f32.gmra.mxu0 %v92
  %v177 = vpop.f32.mrf.mxu0
  %v178 = vadd.f32 0.0, %v177
  %179 = vmatmul.f32.gmra.mxu0 %v93
  %v180 = vpop.f32.mrf.mxu0
  %v181 = vadd.f32 0.0, %v180
  %182 = vmatmul.f32.gmra.mxu0 %v94
  %v183 = vpop.f32.mrf.mxu0
  %v184 = vadd.f32 0.0, %v183
  %185 = vmatmul.f32.gmra.mxu0 %v95
  %v186 = vpop.f32.mrf.mxu0
  %v187 = vadd.f32 0.0, %v186
  %188 = vmatmul.f32.gmra.mxu0 %v96
  %v189 = vpop.f32.mrf.mxu0
  %v190 = vadd.f32 0.0, %v189
  %191 = vmatmul.f32.gmra.mxu0 %v97
  %v192 = vpop.f32.mrf.mxu0
  %v193 = vadd.f32 0.0, %v192
  %194 = vmatmul.f32.gmra.mxu0 %v98
  %v195 = vpop.f32.mrf.mxu0
  %v196 = vadd.f32 0.0, %v195
  %197 = vmatmul.f32.gmra.mxu0 %v99
  %v198 = vpop.f32.mrf.mxu0
  %v199 = vadd.f32 0.0, %v198
  %200 = vmatmul.f32.gmra.mxu0 %v100
  %v201 = vpop.f32.mrf.mxu0
  %v202 = vadd.f32 0.0, %v201
  %203 = vmatmul.f32.gmra.mxu0 %v101
  %v204 = vpop.f32.mrf.mxu0
  %v205 = vadd.f32 0.0, %v204
  %206 = vmatmul.f32.gmra.mxu0 %v102
  %v207 = vpop.f32.mrf.mxu0
  %v208 = vadd.f32 0.0, %v207
  %209 = vmatmul.f32.gmra.mxu0 %v103
  %v210 = vpop.f32.mrf.mxu0
  %v211 = vadd.f32 0.0, %v210
  %212 = vmatmul.f32.gmra.mxu0 %v104
  %v213 = vpop.f32.mrf.mxu0
  %v214 = vadd.f32 0.0, %v213
  %215 = vmatmul.f32.gmra.mxu0 %v105
  %v216 = vpop.f32.mrf.mxu0
  %v217 = vadd.f32 0.0, %v216
  %218 = vmatmul.f32.gmra.mxu0 %v106
  %v219 = vpop.f32.mrf.mxu0
  %v220 = vadd.f32 0.0, %v219
  %221 = vmatmul.f32.gmra.mxu0 %v107
  %v222 = vpop.f32.mrf.mxu0
  %v223 = vadd.f32 0.0, %v222
  %224 = vmatmul.f32.gmra.mxu0 %v108
  %v225 = vpop.f32.mrf.mxu0
  %v226 = vadd.f32 0.0, %v225
  %227 = vmatmul.f32.gmra.mxu0 %v109
  %v228 = vpop.f32.mrf.mxu0
  %v229 = vadd.f32 0.0, %v228
  %230 = vmatmul.f32.gmra.mxu0 %v110
  %v231 = vpop.f32.mrf.mxu0
  %v232 = vadd.f32 0.0, %v231
  %233 = vmatmul.f32.gmra.mxu0 %v111
  %v234 = vpop.f32.mrf.mxu0
  %v235 = vadd.f32 0.0, %v234
  %236 = vmatmul.f32.gmra.mxu0 %v112
  %v237 = vpop.f32.mrf.mxu0
  %v238 = vadd.f32 0.0, %v237
  %239 = vmatmul.f32.gmra.mxu0 %v113
  %v240 = vpop.f32.mrf.mxu0
  %v241 = vadd.f32 0.0, %v240
  %242 = vdwg.mxu0
  %v243 = vadd.f32 %v50, %v148
  %v244 = vadd.f32 %v51, %v151
  %v245 = vadd.f32 %v52, %v154
  %v246 = vadd.f32 %v53, %v157
  %v247 = vadd.f32 %v54, %v160
  %v248 = vadd.f32 %v55, %v163
  %v249 = vadd.f32 %v56, %v166
  %v250 = vadd.f32 %v57, %v169
  %v251 = vadd.f32 %v58, %v172
  %v252 = vadd.f32 %v59, %v175
  %v253 = vadd.f32 %v60, %v178
  %v254 = vadd.f32 %v61, %v181
  %v255 = vadd.f32 %v62, %v184
  %v256 = vadd.f32 %v63, %v187
  %v257 = vadd.f32 %v64, %v190
  %v258 = vadd.f32 %v65, %v193
  %v259 = vadd.f32 %v66, %v196
  %v260 = vadd.f32 %v67, %v199
  %v261 = vadd.f32 %v68, %v202
  %v262 = vadd.f32 %v69, %v205
  %v263 = vadd.f32 %v70, %v208
  %v264 = vadd.f32 %v71, %v211
  %v265 = vadd.f32 %v72, %v214
  %v266 = vadd.f32 %v73, %v217
  %v267 = vadd.f32 %v74, %v220
  %v268 = vadd.f32 %v75, %v223
  %v269 = vadd.f32 %v76, %v226
  %v270 = vadd.f32 %v77, %v229
  %v271 = vadd.f32 %v78, %v232
  %v272 = vadd.f32 %v79, %v235
  %v273 = vadd.f32 %v80, %v238
  %v274 = vadd.f32 %v81, %v241
  %275 = vst [vmem:[#allocation2] sm:$0xff] %v243
  %276 = vst [vmem:[#allocation2 + $0x8] sm:$0xff] %v244
  %277 = vst [vmem:[#allocation2 + $0x10] sm:$0xff] %v245
  %278 = vst [vmem:[#allocation2 + $0x18] sm:$0xff] %v246
  %279 = vst [vmem:[#allocation2 + $0x20] sm:$0xff] %v247
  %280 = vst [vmem:[#allocation2 + $0x28] sm:$0xff] %v248
  %281 = vst [vmem:[#allocation2 + $0x30] sm:$0xff] %v249
  %282 = vst [vmem:[#allocation2 + $0x38] sm:$0xff] %v250
  %283 = vst [vmem:[#allocation2 + $0x40] sm:$0xff] %v251
  %284 = vst [vmem:[#allocation2 + $0x48] sm:$0xff] %v252
  %285 = vst [vmem:[#allocation2 + $0x50] sm:$0xff] %v253
  %286 = vst [vmem:[#allocation2 + $0x58] sm:$0xff] %v254
  %287 = vst [vmem:[#allocation2 + $0x60] sm:$0xff] %v255
  %288 = vst [vmem:[#allocation2 + $0x68] sm:$0xff] %v256
  %289 = vst [vmem:[#allocation2 + $0x70] sm:$0xff] %v257
  %290 = vst [vmem:[#allocation2 + $0x78] sm:$0xff] %v258
  %291 = vst [vmem:[#allocation2 + $0x80] sm:$0xff] %v259
  %292 = vst [vmem:[#allocation2 + $0x88] sm:$0xff] %v260
  %293 = vst [vmem:[#allocation2 + $0x90] sm:$0xff] %v261
  %294 = vst [vmem:[#allocation2 + $0x98] sm:$0xff] %v262
  %295 = vst [vmem:[#allocation2 + $0xa0] sm:$0xff] %v263
  %296 = vst [vmem:[#allocation2 + $0xa8] sm:$0xff] %v264
  %297 = vst [vmem:[#allocation2 + $0xb0] sm:$0xff] %v265
  %298 = vst [vmem:[#allocation2 + $0xb8] sm:$0xff] %v266
  %299 = vst [vmem:[#allocation2 + $0xc0] sm:$0xff] %v267
  %300 = vst [vmem:[#allocation2 + $0xc8] sm:$0xff] %v268
  %301 = vst [vmem:[#allocation2 + $0xd0] sm:$0xff] %v269
  %302 = vst [vmem:[#allocation2 + $0xd8] sm:$0xff] %v270
  %303 = vst [vmem:[#allocation2 + $0xe0] sm:$0xff] %v271
  %304 = vst [vmem:[#allocation2 + $0xe8] sm:$0xff] %v272
  %305 = vst [vmem:[#allocation2 + $0xf0] sm:$0xff] %v273
  %306 = vst [vmem:[#allocation2 + $0xf8] sm:$0xff] %v274
  // Predicated region
  $region18: #{faster_rcnn_forward.5} parent=0 // pred_check
    %p307 = pneg %p14
  $region19: #{faster_rcnn_forward.5} parent=0 // pred_check_branch
    %309 = sbr.rel (%p307) target = $region21
  $region20: #{faster_rcnn_forward.5} parent=0 // pred_region
    %v310 = vld [vmem:[#allocation2] sm:$0xff]
    %v311 = vld [vmem:[#allocation2 + $0x8] sm:$0xff]
    %v312 = vld [vmem:[#allocation2 + $0x10] sm:$0xff]
    %v313 = vld [vmem:[#allocation2 + $0x18] sm:$0xff]
    %v314 = vld [vmem:[#allocation2 + $0x20] sm:$0xff]
    %v315 = vld [vmem:[#allocation2 + $0x28] sm:$0xff]
    %v316 = vld [vmem:[#allocation2 + $0x30] sm:$0xff]
    %v317 = vld [vmem:[#allocation2 + $0x38] sm:$0xff]
    %v318 = vld [vmem:[#allocation2 + $0x40] sm:$0xff]
    %v319 = vld [vmem:[#allocation2 + $0x48] sm:$0xff]
    %v320 = vld [vmem:[#allocation2 + $0x50] sm:$0xff]
    %v321 = vld [vmem:[#allocation2 + $0x58] sm:$0xff]
    %v322 = vld [vmem:[#allocation2 + $0x60] sm:$0xff]
    %v323 = vld [vmem:[#allocation2 + $0x68] sm:$0xff]
    %v324 = vld [vmem:[#allocation2 + $0x70] sm:$0xff]
    %v325 = vld [vmem:[#allocation2 + $0x78] sm:$0xff]
    %v326 = vld [vmem:[#allocation2 + $0x80] sm:$0xff]
    %v327 = vld [vmem:[#allocation2 + $0x88] sm:$0xff]
    %v328 = vld [vmem:[#allocation2 + $0x90] sm:$0xff]
    %v329 = vld [vmem:[#allocation2 + $0x98] sm:$0xff]
    %v330 = vld [vmem:[#allocation2 + $0xa0] sm:$0xff]
    %v331 = vld [vmem:[#allocation2 + $0xa8] sm:$0xff]
    %v332 = vld [vmem:[#allocation2 + $0xb0] sm:$0xff]
    %v333 = vld [vmem:[#allocation2 + $0xb8] sm:$0xff]
    %v334 = vld [vmem:[#allocation2 + $0xc0] sm:$0xff]
    %v335 = vld [vmem:[#allocation2 + $0xc8] sm:$0xff]
    %v336 = vld [vmem:[#allocation2 + $0xd0] sm:$0xff]
    %v337 = vld [vmem:[#allocation2 + $0xd8] sm:$0xff]
    %v338 = vld [vmem:[#allocation2 + $0xe0] sm:$0xff]
    %v339 = vld [vmem:[#allocation2 + $0xe8] sm:$0xff]
    %v340 = vld [vmem:[#allocation2 + $0xf0] sm:$0xff]
    %v341 = vld [vmem:[#allocation2 + $0xf8] sm:$0xff]
    %v342 = vld [vmem:[%s2] sm:$0x1]
    %v344 = vperm.slane %v342, 0
    %v346 = vadd.f32 %v310, %v344
    %v347 = vadd.f32 %v311, %v344
    %v348 = vadd.f32 %v312, %v344
    %v349 = vadd.f32 %v313, %v344
    %v350 = vadd.f32 %v314, %v344
    %v351 = vadd.f32 %v315, %v344
    %v352 = vadd.f32 %v316, %v344
    %v353 = vadd.f32 %v317, %v344
    %v354 = vadd.f32 %v318, %v344
    %v355 = vadd.f32 %v319, %v344
    %v356 = vadd.f32 %v320, %v344
    %v357 = vadd.f32 %v321, %v344
    %v358 = vadd.f32 %v322, %v344
    %v359 = vadd.f32 %v323, %v344
    %v360 = vadd.f32 %v324, %v344
    %v361 = vadd.f32 %v325, %v344
    %v362 = vadd.f32 %v326, %v344
    %v363 = vadd.f32 %v327, %v344
    %v364 = vadd.f32 %v328, %v344
    %v365 = vadd.f32 %v329, %v344
    %v366 = vadd.f32 %v330, %v344
    %v367 = vadd.f32 %v331, %v344
    %v368 = vadd.f32 %v332, %v344
    %v369 = vadd.f32 %v333, %v344
    %v370 = vadd.f32 %v334, %v344
    %v371 = vadd.f32 %v335, %v344
    %v372 = vadd.f32 %v336, %v344
    %v373 = vadd.f32 %v337, %v344
    %v374 = vadd.f32 %v338, %v344
    %v375 = vadd.f32 %v339, %v344
    %v376 = vadd.f32 %v340, %v344
    %v377 = vadd.f32 %v341, %v344
    %v378 = vmax.f32 %v346, 0.0
    %v379 = vmax.f32 %v347, 0.0
    %v380 = vmax.f32 %v348, 0.0
    %v381 = vmax.f32 %v349, 0.0
    %v382 = vmax.f32 %v350, 0.0
    %v383 = vmax.f32 %v351, 0.0
    %v384 = vmax.f32 %v352, 0.0
    %v385 = vmax.f32 %v353, 0.0
    %v386 = vmax.f32 %v354, 0.0
    %v387 = vmax.f32 %v355, 0.0
    %v388 = vmax.f32 %v356, 0.0
    %v389 = vmax.f32 %v357, 0.0
    %v390 = vmax.f32 %v358, 0.0
    %v391 = vmax.f32 %v359, 0.0
    %v392 = vmax.f32 %v360, 0.0
    %v393 = vmax.f32 %v361, 0.0
    %v394 = vmax.f32 %v362, 0.0
    %v395 = vmax.f32 %v363, 0.0
    %v396 = vmax.f32 %v364, 0.0
    %v397 = vmax.f32 %v365, 0.0
    %v398 = vmax.f32 %v366, 0.0
    %v399 = vmax.f32 %v367, 0.0
    %v400 = vmax.f32 %v368, 0.0
    %v401 = vmax.f32 %v369, 0.0
    %v402 = vmax.f32 %v370, 0.0
    %v403 = vmax.f32 %v371, 0.0
    %v404 = vmax.f32 %v372, 0.0
    %v405 = vmax.f32 %v373, 0.0
    %v406 = vmax.f32 %v374, 0.0
    %v407 = vmax.f32 %v375, 0.0
    %v408 = vmax.f32 %v376, 0.0
    %v409 = vmax.f32 %v377, 0.0
    %410 = vst [vmem:[%s3] sm:$0xff] %v378
    %411 = vst [vmem:[%s3 + $0x8] sm:$0xff] %v379
    %412 = vst [vmem:[%s3 + $0x10] sm:$0xff] %v380
    %413 = vst [vmem:[%s3 + $0x18] sm:$0xff] %v381
    %414 = vst [vmem:[%s3 + $0x20] sm:$0xff] %v382
    %415 = vst [vmem:[%s3 + $0x28] sm:$0xff] %v383
    %416 = vst [vmem:[%s3 + $0x30] sm:$0xff] %v384
    %417 = vst [vmem:[%s3 + $0x38] sm:$0xff] %v385
    %418 = vst [vmem:[%s3 + $0x40] sm:$0xff] %v386
    %419 = vst [vmem:[%s3 + $0x48] sm:$0xff] %v387
    %420 = vst [vmem:[%s3 + $0x50] sm:$0xff] %v388
    %421 = vst [vmem:[%s3 + $0x58] sm:$0xff] %v389
    %422 = vst [vmem:[%s3 + $0x60] sm:$0xff] %v390
    %423 = vst [vmem:[%s3 + $0x68] sm:$0xff] %v391
    %424 = vst [vmem:[%s3 + $0x70] sm:$0xff] %v392
    %425 = vst [vmem:[%s3 + $0x78] sm:$0xff] %v393
    %426 = vst [vmem:[%s3 + $0x80] sm:$0xff] %v394
    %427 = vst [vmem:[%s3 + $0x88] sm:$0xff] %v395
    %428 = vst [vmem:[%s3 + $0x90] sm:$0xff] %v396
    %429 = vst [vmem:[%s3 + $0x98] sm:$0xff] %v397
    %430 = vst [vmem:[%s3 + $0xa0] sm:$0xff] %v398
    %431 = vst [vmem:[%s3 + $0xa8] sm:$0xff] %v399
    %432 = vst [vmem:[%s3 + $0xb0] sm:$0xff] %v400
    %433 = vst [vmem:[%s3 + $0xb8] sm:$0xff] %v401
    %434 = vst [vmem:[%s3 + $0xc0] sm:$0xff] %v402
    %435 = vst [vmem:[%s3 + $0xc8] sm:$0xff] %v403
    %436 = vst [vmem:[%s3 + $0xd0] sm:$0xff] %v404
    %437 = vst [vmem:[%s3 + $0xd8] sm:$0xff] %v405
    %438 = vst [vmem:[%s3 + $0xe0] sm:$0xff] %v406
    %439 = vst [vmem:[%s3 + $0xe8] sm:$0xff] %v407
    %440 = vst [vmem:[%s3 + $0xf0] sm:$0xff] %v408
    %441 = vst [vmem:[%s3 + $0xf8] sm:$0xff] %v409
  $region21: #{faster_rcnn_forward.5} parent=0 // pred_fallthru
    _
  // Predicated region
  $region22: #{faster_rcnn_forward.5} parent=0 // pred_check
    _
  $region23: #{faster_rcnn_forward.5} parent=0 // pred_check_branch
    %443 = sbr.rel (0) target = $region25
  $region24: #{faster_rcnn_forward.5} parent=0 // pred_region
    _
  $region25: #{faster_rcnn_forward.5} parent=0 // pred_fallthru
    _
  // Predicated region
  $region26: #{faster_rcnn_forward.5} parent=0 // pred_check
    _
  $region27: #{faster_rcnn_forward.5} parent=0 // pred_check_branch
    %445 = sbr.rel (0) target = $region29
  $region28: #{faster_rcnn_forward.5} parent=0 // pred_region
    _
  $region29: #{faster_rcnn_forward.5} parent=0 // pred_fallthru
    _

// kernel: faster_rcnn_forward.6
$region0: #{faster_rcnn_forward.6}
  #allocation0 [shape = 'u32[]', space=smem, size = 0x4, offset = 0x4, fixed_abs, tag = 'smem constant byte address 0x4 - core index']
  #allocation1 [shape = 'u32[72,128]{1,0:T(1,128)}', space=vmem, size = 0x9000, scoped, tag = 'internal scratch']
  #allocation2 [shape = 'f32[64,128]{1,0:T(8,128)}', space=vmem, size = 0x8000, scoped, tag = 'scratch operand']
  %s0 = inlined_call_operand.vmem [shape: f32[64,128], index: 0, kind: input, shape index: {}]
  %s1 = inlined_call_operand.vmem [shape: f32[128,128], index: 1, kind: input, shape index: {}]
  %s2 = inlined_call_operand.vmem [shape: f32[1,128], index: 2, kind: input, shape index: {}]
  %s3 = inlined_call_operand.vmem [shape: f32[64,128], index: 3, kind: output, shape index: {}]
  %s4 = sld [smem:[#allocation0]]
  $region30: #{faster_rcnn_forward.6} parent=0
    _
  %s6 = ssub.s32 1, %s4
  %s7 = scalar_select 0, %s6, %s4
  // Predicated region
  $region2: #{faster_rcnn_forward.6} parent=0 // pred_check
    _
  $region3: #{faster_rcnn_forward.6} parent=0 // pred_check_branch
    %9 = sbr.rel (0) target = $region5
  $region4: #{faster_rcnn_forward.6} parent=0 // pred_region
    _
  $region5: #{faster_rcnn_forward.6} parent=0 // pred_fallthru
    _
  // Predicated region
  $region6: #{faster_rcnn_forward.6} parent=0 // pred_check
    _
  $region7: #{faster_rcnn_forward.6} parent=0 // pred_check_branch
    %11 = sbr.rel (0) target = $region9
  $region8: #{faster_rcnn_forward.6} parent=0 // pred_region
    _
  $region9: #{faster_rcnn_forward.6} parent=0 // pred_fallthru
    _
  // Predicated region
  $region10: #{faster_rcnn_forward.6} parent=0 // pred_check
    _
  $region11: #{faster_rcnn_forward.6} parent=0 // pred_check_branch
    %13 = sbr.rel (0) target = $region13
  $region12: #{faster_rcnn_forward.6} parent=0 // pred_region
    _
  $region13: #{faster_rcnn_forward.6} parent=0 // pred_fallthru
    _
  %p14 = scmp.eq.s32.totalorder 0, 0
  // Predicated region
  $region14: #{faster_rcnn_forward.6} parent=0 // pred_check
    %p15 = pneg %p14
  $region15: #{faster_rcnn_forward.6} parent=0 // pred_check_branch
    %17 = sbr.rel (%p15) target = $region17
  $region16: #{faster_rcnn_forward.6} parent=0 // pred_region
    %18 = vst [vmem:[#allocation2] sm:$0xff] 0.0
    %19 = vst [vmem:[#allocation2 + $0x8] sm:$0xff] 0.0
    %20 = vst [vmem:[#allocation2 + $0x10] sm:$0xff] 0.0
    %21 = vst [vmem:[#allocation2 + $0x18] sm:$0xff] 0.0
    %22 = vst [vmem:[#allocation2 + $0x20] sm:$0xff] 0.0
    %23 = vst [vmem:[#allocation2 + $0x28] sm:$0xff] 0.0
    %24 = vst [vmem:[#allocation2 + $0x30] sm:$0xff] 0.0
    %25 = vst [vmem:[#allocation2 + $0x38] sm:$0xff] 0.0
  $region17: #{faster_rcnn_forward.6} parent=0 // pred_fallthru
    _
  %v26 = vld [vmem:[#allocation2] sm:$0xff]
  %v27 = vld [vmem:[#allocation2 + $0x8] sm:$0xff]
  %v28 = vld [vmem:[#allocation2 + $0x10] sm:$0xff]
  %v29 = vld [vmem:[#allocation2 + $0x18] sm:$0xff]
  %v30 = vld [vmem:[#allocation2 + $0x20] sm:$0xff]
  %v31 = vld [vmem:[#allocation2 + $0x28] sm:$0xff]
  %v32 = vld [vmem:[#allocation2 + $0x30] sm:$0xff]
  %v33 = vld [vmem:[#allocation2 + $0x38] sm:$0xff]
  %v34 = vld [vmem:[%s0] sm:$0xff]
  %v35 = vld [vmem:[%s0 + $0x8] sm:$0xff]
  %v36 = vld [vmem:[%s0 + $0x10] sm:$0xff]
  %v37 = vld [vmem:[%s0 + $0x18] sm:$0xff]
  %v38 = vld [vmem:[%s0 + $0x20] sm:$0xff]
  %v39 = vld [vmem:[%s0 + $0x28] sm:$0xff]
  %v40 = vld [vmem:[%s0 + $0x30] sm:$0xff]
  %v41 = vld [vmem:[%s0 + $0x38] sm:$0xff]
  %v42 = vld [vmem:[%s1] sm:$0xff]
  %v43 = vld [vmem:[%s1 + $0x8] sm:$0xff]
  %v44 = vld [vmem:[%s1 + $0x10] sm:$0xff]
  %v45 = vld [vmem:[%s1 + $0x18] sm:$0xff]
  %v46 = vld [vmem:[%s1 + $0x20] sm:$0xff]
  %v47 = vld [vmem:[%s1 + $0x28] sm:$0xff]
  %v48 = vld [vmem:[%s1 + $0x30] sm:$0xff]
  %v49 = vld [vmem:[%s1 + $0x38] sm:$0xff]
  %v50 = vld [vmem:[%s1 + $0x40] sm:$0xff]
  %v51 = vld [vmem:[%s1 + $0x48] sm:$0xff]
  %v52 = vld [vmem:[%s1 + $0x50] sm:$0xff]
  %v53 = vld [vmem:[%s1 + $0x58] sm:$0xff]
  %v54 = vld [vmem:[%s1 + $0x60] sm:$0xff]
  %v55 = vld [vmem:[%s1 + $0x68] sm:$0xff]
  %v56 = vld [vmem:[%s1 + $0x70] sm:$0xff]
  %v57 = vld [vmem:[%s1 + $0x78] sm:$0xff]
  %58 = vmatpush.msra.mxu0 %v57
  %59 = vmatpush.msra.mxu0 %v56
  %60 = vmatpush.msra.mxu0 %v55
  %61 = vmatpush.msra.mxu0 %v54
  %62 = vmatpush.msra.mxu0 %v53
  %63 = vmatpush.msra.mxu0 %v52
  %64 = vmatpush.msra.mxu0 %v51
  %65 = vmatpush.msra.mxu0 %v50
  %66 = vmatpush.msra.mxu0 %v49
  %67 = vmatpush.msra.mxu0 %v48
  %68 = vmatpush.msra.mxu0 %v47
  %69 = vmatpush.msra.mxu0 %v46
  %70 = vmatpush.msra.mxu0 %v45
  %71 = vmatpush.msra.mxu0 %v44
  %72 = vmatpush.msra.mxu0 %v43
  %73 = vmatpush.msra.mxu0 %v42
  %74 = vmatmul.f32.gmra.mxu0 %v34
  %v75 = vpop.f32.mrf.mxu0
  %v76 = vadd.f32 0.0, %v75
  %77 = vmatmul.f32.gmra.mxu0 %v35
  %v78 = vpop.f32.mrf.mxu0
  %v79 = vadd.f32 0.0, %v78
  %80 = vmatmul.f32.gmra.mxu0 %v36
  %v81 = vpop.f32.mrf.mxu0
  %v82 = vadd.f32 0.0, %v81
  %83 = vmatmul.f32.gmra.mxu0 %v37
  %v84 = vpop.f32.mrf.mxu0
  %v85 = vadd.f32 0.0, %v84
  %86 = vmatmul.f32.gmra.mxu0 %v38
  %v87 = vpop.f32.mrf.mxu0
  %v88 = vadd.f32 0.0, %v87
  %89 = vmatmul.f32.gmra.mxu0 %v39
  %v90 = vpop.f32.mrf.mxu0
  %v91 = vadd.f32 0.0, %v90
  %92 = vmatmul.f32.gmra.mxu0 %v40
  %v93 = vpop.f32.mrf.mxu0
  %v94 = vadd.f32 0.0, %v93
  %95 = vmatmul.f32.gmra.mxu0 %v41
  %v96 = vpop.f32.mrf.mxu0
  %v97 = vadd.f32 0.0, %v96
  %98 = vdwg.mxu0
  %v99 = vadd.f32 %v26, %v76
  %v100 = vadd.f32 %v27, %v79
  %v101 = vadd.f32 %v28, %v82
  %v102 = vadd.f32 %v29, %v85
  %v103 = vadd.f32 %v30, %v88
  %v104 = vadd.f32 %v31, %v91
  %v105 = vadd.f32 %v32, %v94
  %v106 = vadd.f32 %v33, %v97
  %107 = vst [vmem:[#allocation2] sm:$0xff] %v99
  %108 = vst [vmem:[#allocation2 + $0x8] sm:$0xff] %v100
  %109 = vst [vmem:[#allocation2 + $0x10] sm:$0xff] %v101
  %110 = vst [vmem:[#allocation2 + $0x18] sm:$0xff] %v102
  %111 = vst [vmem:[#allocation2 + $0x20] sm:$0xff] %v103
  %112 = vst [vmem:[#allocation2 + $0x28] sm:$0xff] %v104
  %113 = vst [vmem:[#allocation2 + $0x30] sm:$0xff] %v105
  %114 = vst [vmem:[#allocation2 + $0x38] sm:$0xff] %v106
  // Predicated region
  $region18: #{faster_rcnn_forward.6} parent=0 // pred_check
    %p115 = pneg %p14
  $region19: #{faster_rcnn_forward.6} parent=0 // pred_check_branch
    %117 = sbr.rel (%p115) target = $region21
  $region20: #{faster_rcnn_forward.6} parent=0 // pred_region
    %v118 = vld [vmem:[#allocation2] sm:$0xff]
    %v119 = vld [vmem:[#allocation2 + $0x8] sm:$0xff]
    %v120 = vld [vmem:[#allocation2 + $0x10] sm:$0xff]
    %v121 = vld [vmem:[#allocation2 + $0x18] sm:$0xff]
    %v122 = vld [vmem:[#allocation2 + $0x20] sm:$0xff]
    %v123 = vld [vmem:[#allocation2 + $0x28] sm:$0xff]
    %v124 = vld [vmem:[#allocation2 + $0x30] sm:$0xff]
    %v125 = vld [vmem:[#allocation2 + $0x38] sm:$0xff]
    %v126 = vld [vmem:[%s2] sm:$0x1]
    %v128 = vperm.slane %v126, 0
    %v130 = vadd.f32 %v118, %v128
    %v131 = vadd.f32 %v119, %v128
    %v132 = vadd.f32 %v120, %v128
    %v133 = vadd.f32 %v121, %v128
    %v134 = vadd.f32 %v122, %v128
    %v135 = vadd.f32 %v123, %v128
    %v136 = vadd.f32 %v124, %v128
    %v137 = vadd.f32 %v125, %v128
    %v138 = vmax.f32 %v130, 0.0
    %v139 = vmax.f32 %v131, 0.0
    %v140 = vmax.f32 %v132, 0.0
    %v141 = vmax.f32 %v133, 0.0
    %v142 = vmax.f32 %v134, 0.0
    %v143 = vmax.f32 %v135, 0.0
    %v144 = vmax.f32 %v136, 0.0
    %v145 = vmax.f32 %v137, 0.0
    %146 = vst [vmem:[%s3] sm:$0xff] %v138
    %147 = vst [vmem:[%s3 + $0x8] sm:$0xff] %v139
    %148 = vst [vmem:[%s3 + $0x10] sm:$0xff] %v140
    %149 = vst [vmem:[%s3 + $0x18] sm:$0xff] %v141
    %150 = vst [vmem:[%s3 + $0x20] sm:$0xff] %v142
    %151 = vst [vmem:[%s3 + $0x28] sm:$0xff] %v143
    %152 = vst [vmem:[%s3 + $0x30] sm:$0xff] %v144
    %153 = vst [vmem:[%s3 + $0x38] sm:$0xff] %v145
  $region21: #{faster_rcnn_forward.6} parent=0 // pred_fallthru
    _
  // Predicated region
  $region22: #{faster_rcnn_forward.6} parent=0 // pred_check
    _
  $region23: #{faster_rcnn_forward.6} parent=0 // pred_check_branch
    %155 = sbr.rel (0) target = $region25
  $region24: #{faster_rcnn_forward.6} parent=0 // pred_region
    _
  $region25: #{faster_rcnn_forward.6} parent=0 // pred_fallthru
    _
  // Predicated region
  $region26: #{faster_rcnn_forward.6} parent=0 // pred_check
    _
  $region27: #{faster_rcnn_forward.6} parent=0 // pred_check_branch
    %157 = sbr.rel (0) target = $region29
  $region28: #{faster_rcnn_forward.6} parent=0 // pred_region
    _
  $region29: #{faster_rcnn_forward.6} parent=0 // pred_fallthru
    _

// kernel: faster_rcnn_forward.7
$region0: #{faster_rcnn_forward.7}
  #allocation0 [shape = 'u32[]', space=smem, size = 0x4, offset = 0x4, fixed_abs, tag = 'smem constant byte address 0x4 - core index']
  #allocation1 [shape = 'u32[72,128]{1,0:T(1,128)}', space=vmem, size = 0x9000, scoped, tag = 'internal scratch']
  %s0 = inlined_call_operand.vmem [shape: f32[144,64], index: 0, kind: input, shape index: {}]
  %s1 = inlined_call_operand.vmem [shape: f32[16,144], index: 1, kind: input, shape index: {}]
  %s2 = inlined_call_operand.vmem [shape: f32[16,1], index: 2, kind: input, shape index: {}]
  %s3 = inlined_call_operand.vmem [shape: f32[18,16], index: 3, kind: input, shape index: {}]
  %s4 = inlined_call_operand.vmem [shape: f32[18,1], index: 4, kind: input, shape index: {}]
  %s5 = inlined_call_operand.vmem [shape: f32[12,64], index: 5, kind: input, shape index: {}]
  %s6 = inlined_call_operand.vmem [shape: f32[12,64], index: 6, kind: output, shape index: {0}]
  %s7 = inlined_call_operand.vmem [shape: f32[3,64], index: 7, kind: output, shape index: {1}]
  %8 = xla_tuple %s6, %s7
  %s9 = sld [smem:[#allocation0]]
  $region42: #{faster_rcnn_forward.7} parent=0
    _
  %s11 = ssub.s32 1, %s9
  %s12 = scalar_select 0, %s11, %s9
  // Predicated region
  $region2: #{faster_rcnn_forward.7} parent=0 // pred_check
    _
  $region3: #{faster_rcnn_forward.7} parent=0 // pred_check_branch
    %14 = sbr.rel (0) target = $region5
  $region4: #{faster_rcnn_forward.7} parent=0 // pred_region
    _
  $region5: #{faster_rcnn_forward.7} parent=0 // pred_fallthru
    _
  // Predicated region
  $region6: #{faster_rcnn_forward.7} parent=0 // pred_check
    _
  $region7: #{faster_rcnn_forward.7} parent=0 // pred_check_branch
    %16 = sbr.rel (0) target = $region9
  $region8: #{faster_rcnn_forward.7} parent=0 // pred_region
    _
  $region9: #{faster_rcnn_forward.7} parent=0 // pred_fallthru
    _
  // Predicated region
  $region10: #{faster_rcnn_forward.7} parent=0 // pred_check
    _
  $region11: #{faster_rcnn_forward.7} parent=0 // pred_check_branch
    %18 = sbr.rel (0) target = $region13
  $region12: #{faster_rcnn_forward.7} parent=0 // pred_region
    _
  $region13: #{faster_rcnn_forward.7} parent=0 // pred_fallthru
    _
  // Predicated region
  $region14: #{faster_rcnn_forward.7} parent=0 // pred_check
    _
  $region15: #{faster_rcnn_forward.7} parent=0 // pred_check_branch
    %20 = sbr.rel (0) target = $region17
  $region16: #{faster_rcnn_forward.7} parent=0 // pred_region
    _
  $region17: #{faster_rcnn_forward.7} parent=0 // pred_fallthru
    _
  // Predicated region
  $region18: #{faster_rcnn_forward.7} parent=0 // pred_check
    _
  $region19: #{faster_rcnn_forward.7} parent=0 // pred_check_branch
    %22 = sbr.rel (0) target = $region21
  $region20: #{faster_rcnn_forward.7} parent=0 // pred_region
    _
  $region21: #{faster_rcnn_forward.7} parent=0 // pred_fallthru
    _
  // Predicated region
  $region22: #{faster_rcnn_forward.7} parent=0 // pred_check
    _
  $region23: #{faster_rcnn_forward.7} parent=0 // pred_check_branch
    %24 = sbr.rel (0) target = $region25
  $region24: #{faster_rcnn_forward.7} parent=0 // pred_region
    _
  $region25: #{faster_rcnn_forward.7} parent=0 // pred_fallthru
    _
  %v25 = vld [vmem:[%s1] sm:$0xff]
  %v26 = vld [vmem:[%s1 + $0x8] sm:$0xff]
  %v27 = vld [vmem:[%s1 + $0x10] sm:$0xff]
  %v28 = vld [vmem:[%s1 + $0x18] sm:$0xff]
  %v29 = vld [vmem:[%s0] sm:$0xff]
  %v30 = vld [vmem:[%s0 + $0x8] sm:$0xff]
  %v31 = vld [vmem:[%s0 + $0x10] sm:$0xff]
  %v32 = vld [vmem:[%s0 + $0x18] sm:$0xff]
  %v33 = vld [vmem:[%s0 + $0x20] sm:$0xff]
  %v34 = vld [vmem:[%s0 + $0x28] sm:$0xff]
  %v35 = vld [vmem:[%s0 + $0x30] sm:$0xff]
  %v36 = vld [vmem:[%s0 + $0x38] sm:$0xff]
  %v37 = vld [vmem:[%s0 + $0x40] sm:$0xff]
  %v38 = vld [vmem:[%s0 + $0x48] sm:$0xff]
  %v39 = vld [vmem:[%s0 + $0x50] sm:$0xff]
  %v40 = vld [vmem:[%s0 + $0x58] sm:$0xff]
  %v41 = vld [vmem:[%s0 + $0x60] sm:$0xff]
  %v42 = vld [vmem:[%s0 + $0x68] sm:$0xff]
  %v43 = vld [vmem:[%s0 + $0x70] sm:$0xff]
  %v44 = vld [vmem:[%s0 + $0x78] sm:$0xff]
  %v45 = vld [vmem:[%s0 + $0x80] sm:$0xff]
  %v46 = vld [vmem:[%s0 + $0x88] sm:$0xff]
  %v47 = vld [vmem:[%s2] sm:$0xff]
  %v48 = vld [vmem:[%s2 + $0x8] sm:$0xff]
  %50 = vset.pattern.permute.xlu0 0
  %51 = vperm.xlu0 %50, %v47
  %v52 = vpop.permute.xlu0 %51
  %55 = vset.pattern.permute.xlu0 0
  %56 = vperm.xlu0 %55, %v48
  %v57 = vpop.permute.xlu0 %56
  %vm59 = vcmask 130048
  %v61 = vsel %vm59, %v26, 0
  %v64 = vsel %vm59, %v28, 0
  %66 = vmatpush.msra.mxu0 %v44
  %67 = vmatpush.msra.mxu0 %v43
  %68 = vmatpush.msra.mxu0 %v42
  %69 = vmatpush.msra.mxu0 %v41
  %70 = vmatpush.msra.mxu0 %v40
  %71 = vmatpush.msra.mxu0 %v39
  %72 = vmatpush.msra.mxu0 %v38
  %73 = vmatpush.msra.mxu0 %v37
  %74 = vmatpush.msra.mxu0 %v36
  %75 = vmatpush.msra.mxu0 %v35
  %76 = vmatpush.msra.mxu0 %v34
  %77 = vmatpush.msra.mxu0 %v33
  %78 = vmatpush.msra.mxu0 %v32
  %79 = vmatpush.msra.mxu0 %v31
  %80 = vmatpush.msra.mxu0 %v30
  %81 = vmatpush.msra.mxu0 %v29
  %82 = vmatmul.f32.gmra.mxu0 %v25
  %v83 = vpop.f32.mrf.mxu0
  %v84 = vadd.f32 %v52, %v83
  %85 = vmatmul.f32.gmra.mxu0 %v27
  %v86 = vpop.f32.mrf.mxu0
  %v87 = vadd.f32 %v57, %v86
  %88 = vdwg.mxu0
  %89 = vmatpush.msra.mxu0 0.0
  %90 = vmatpush.msra.mxu0 0.0
  %91 = vmatpush.msra.mxu0 0.0
  %92 = vmatpush.msra.mxu0 0.0
  %93 = vmatpush.msra.mxu0 0.0
  %94 = vmatpush.msra.mxu0 0.0
  %95 = vmatpush.msra.mxu0 0.0
  %96 = vmatpush.msra.mxu0 0.0
  %97 = vmatpush.msra.mxu0 0.0
  %98 = vmatpush.msra.mxu0 0.0
  %99 = vmatpush.msra.mxu0 0.0
  %100 = vmatpush.msra.mxu0 0.0
  %101 = vmatpush.msra.mxu0 0.0
  %102 = vmatpush.msra.mxu0 0.0
  %103 = vmatpush.msra.mxu0 %v46
  %104 = vmatpush.msra.mxu0 %v45
  %105 = vmatmul.f32.gmra.mxu0 %v61
  %v106 = vpop.f32.mrf.mxu0
  %v107 = vadd.f32 %v84, %v106
  %108 = vmatmul.f32.gmra.mxu0 %v64
  %v109 = vpop.f32.mrf.mxu0
  %v110 = vadd.f32 %v87, %v109
  %111 = vdwg.mxu0
  %v112 = vmax.f32 %v107, 0.0
  %v113 = vmax.f32 %v110, 0.0
  %v114 = vld [vmem:[%s3] sm:$0xff]
  %v115 = vld [vmem:[%s3 + $0x8] sm:$0xff]
  %v116 = vld [vmem:[%s3 + $0x10] sm:$0x3]
  %v117 = vld [vmem:[%s4] sm:$0xff]
  %v118 = vld [vmem:[%s4 + $0x8] sm:$0xff]
  %v119 = vld [vmem:[%s4 + $0x10] sm:$0x3]
  %121 = vset.pattern.permute.xlu0 0
  %122 = vperm.xlu0 %121, %v117
  %v123 = vpop.permute.xlu0 %122
  %126 = vset.pattern.permute.xlu0 0
  %127 = vperm.xlu0 %126, %v118
  %v128 = vpop.permute.xlu0 %127
  %131 = vset.pattern.permute.xlu0 0
  %132 = vperm.xlu0 %131, %v119
  %v133 = vpop.permute.xlu0 %132
  %v136 = vsel %vm59, %v114, 0
  %v139 = vsel %vm59, %v115, 0
  %v142 = vsel %vm59, %v116, 0
  %144 = vmatpush.msra.mxu0 0.0
  %145 = vmatpush.msra.mxu0 0.0
  %146 = vmatpush.msra.mxu0 0.0
  %147 = vmatpush.msra.mxu0 0.0
  %148 = vmatpush.msra.mxu0 0.0
  %149 = vmatpush.msra.mxu0 0.0
  %150 = vmatpush.msra.mxu0 0.0
  %151 = vmatpush.msra.mxu0 0.0
  %152 = vmatpush.msra.mxu0 0.0
  %153 = vmatpush.msra.mxu0 0.0
  %154 = vmatpush.msra.mxu0 0.0
  %155 = vmatpush.msra.mxu0 0.0
  %156 = vmatpush.msra.mxu0 0.0
  %157 = vmatpush.msra.mxu0 0.0
  %158 = vmatpush.msra.mxu0 %v113
  %159 = vmatpush.msra.mxu0 %v112
  %160 = vmatmul.f32.gmra.mxu0 %v136
  %v161 = vpop.f32.mrf.mxu0
  %v162 = vadd.f32 %v123, %v161
  %163 = vmatmul.f32.gmra.mxu0 %v139
  %v164 = vpop.f32.mrf.mxu0
  %v165 = vadd.f32 %v128, %v164
  %166 = vmatmul.f32.gmra.mxu0 %v142
  %v167 = vpop.f32.mrf.mxu0
  %v168 = vadd.f32 %v133, %v167
  %169 = vdwg.mxu0
  %v171 = vrot.slane %v162, 5
  %v173 = vsub.f32 %v162, %v171
  %v174 = vxor.u32 %v173, 2147483648
  %v175 = vmul.f32 %v174, 1.442695
  %v176 = vpow.pop %v175
  %v177 = vadd.f32 %v176, 1.0
  %v178 = vrcp.pop %v177
  %v179 = vmul.f32 %v177, %v178
  %v180 = vsub.f32 1.0, %v179
  %v181 = vmul.f32 %v178, %v180
  %v182 = vadd.f32 %v178, %v181
  %vm183 = vweird.f32 %v177
  %vm184 = vweird.f32 %v178
  %vm185 = vmor %vm183, %vm184
  %v186 = vsel %vm185, %v178, %v182
  %v187 = vand.u32 2147483647, %v177
  %vm188 = vcmp.eq.f32.partialorder %v187, 8.507059e+37
  %v189 = vand.u32 %v177, 2147483648
  %v190 = vor.u32 1.1754944e-38, %v189
  %v191 = vsel %vm188, %v190, %v186
  %v192 = vmul.f32 1.0, %v191
  %vm193 = vcmask 521219
  %194 = vst.msk [vmem:[%s7 - $0x3] sm:$0x38] %vm193, %v192
  %v195 = vld [vmem:[%s5] sm:$0x7]
  %v196 = vld [vmem:[%s5 + $0x3] sm:$0x7]
  %v197 = vld [vmem:[%s5 + $0x6] sm:$0x7]
  %v198 = vld [vmem:[%s5 + $0x9] sm:$0x7]
  %v199 = vmin.f32 %v165, 4.1351666
  %v200 = vmin.f32 %v168, 4.1351666
  %v201 = vsub.f32 %v197, %v195
  %v202 = vadd.f32 %v201, 1.0
  %v203 = vsub.f32 %v198, %v196
  %v204 = vadd.f32 %v203, 1.0
  %v205 = vmul.f32 %v202, 0.5
  %v206 = vadd.f32 %v195, %v205
  %v207 = vmul.f32 %v204, 0.5
  %v208 = vadd.f32 %v196, %v207
  %v210 = vrot.slane %v202, 2
  %v212 = vmul.f32 %v162, %v210
  %v213 = vmul.f32 %v165, %v210
  %v215 = vrot.slane %v206, 2
  %v217 = vadd.f32 %v212, %v215
  %v218 = vadd.f32 %v213, %v215
  %v220 = vrot.slane %v204, 7
  %v222 = vmul.f32 %v165, %v220
  %v224 = vrot.slane %v208, 7
  %v226 = vadd.f32 %v222, %v224
  %v227 = vmul.f32 %v199, 1.442695
  %v228 = vpow.pop %v227
  %v229 = vrot.slane %v202, 4
  %v231 = vmul.f32 %v228, %v229
  %v232 = vmul.f32 %v200, 1.442695
  %v233 = vpow.pop %v232
  %v234 = vrot.slane %v204, 1
  %v236 = vmul.f32 %v228, %v234
  %v237 = vmul.f32 %v233, %v234
  %v238 = vmul.f32 %v231, 0.5
  %v240 = vrot.slane %v238, 6
  %v242 = vsub.f32 %v217, %v240
  %v243 = vsub.f32 %v218, %v240
  %v244 = vmax.f32 %v242, 0.0
  %v245 = vmax.f32 %v243, 0.0
  %v246 = vmin.f32 %v244, 31.0
  %v247 = vmin.f32 %v245, 31.0
  %vm248 = vcmask 523270
  %249 = vst.msk [vmem:[%s6 - $0x6] sm:$0xc0] %vm248, %v246
  %vm250 = vcmask 516096
  %251 = vst.msk [vmem:[%s6 + $0x2] sm:$0x1] %vm250, %v247
  %v252 = vmul.f32 %v236, 0.5
  %v253 = vmul.f32 %v237, 0.5
  %vm256 = vcmask 1041408
  %v257 = vrot.slane %v252, 6
  %v258 = vrot.slane %v253, 6
  %v259 = vsel %vm256, %v257, %v258
  %v261 = vsub.f32 %v226, %v259
  %v262 = vmax.f32 %v261, 0.0
  %v263 = vmin.f32 %v262, 31.0
  %vm264 = vcmask 519169
  %265 = vst.msk [vmem:[%s6 + $0x2] sm:$0xe] %vm264, %v263
  %v266 = vadd.f32 %v217, %v240
  %v267 = vadd.f32 %v218, %v240
  %v268 = vmax.f32 %v266, 0.0
  %v269 = vmax.f32 %v267, 0.0
  %v270 = vmin.f32 %v268, 31.0
  %v271 = vmin.f32 %v269, 31.0
  %272 = vst.msk [vmem:[%s6] sm:$0xc0] %vm248, %v270
  %273 = vst.msk [vmem:[%s6 + $0x8] sm:$0x1] %vm250, %v271
  %v274 = vadd.f32 %v226, %v259
  %v275 = vmax.f32 %v274, 0.0
  %v276 = vmin.f32 %v275, 31.0
  %277 = vst.msk [vmem:[%s6 + $0x8] sm:$0xe] %vm264, %v276
  // Predicated region
  $region26: #{faster_rcnn_forward.7} parent=0 // pred_check
    _
  $region27: #{faster_rcnn_forward.7} parent=0 // pred_check_branch
    %279 = sbr.rel (0) target = $region29
  $region28: #{faster_rcnn_forward.7} parent=0 // pred_region
    _
  $region29: #{faster_rcnn_forward.7} parent=0 // pred_fallthru
    _
  // Predicated region
  $region30: #{faster_rcnn_forward.7} parent=0 // pred_check
    _
  $region31: #{faster_rcnn_forward.7} parent=0 // pred_check_branch
    %281 = sbr.rel (0) target = $region33
  $region32: #{faster_rcnn_forward.7} parent=0 // pred_region
    _
  $region33: #{faster_rcnn_forward.7} parent=0 // pred_fallthru
    _
  // Predicated region
  $region34: #{faster_rcnn_forward.7} parent=0 // pred_check
    _
  $region35: #{faster_rcnn_forward.7} parent=0 // pred_check_branch
    %283 = sbr.rel (0) target = $region37
  $region36: #{faster_rcnn_forward.7} parent=0 // pred_region
    _
  $region37: #{faster_rcnn_forward.7} parent=0 // pred_fallthru
    _
  // Predicated region
  $region38: #{faster_rcnn_forward.7} parent=0 // pred_check
    _
  $region39: #{faster_rcnn_forward.7} parent=0 // pred_check_branch
    %285 = sbr.rel (0) target = $region41
  $region40: #{faster_rcnn_forward.7} parent=0 // pred_region
    _
  $region41: #{faster_rcnn_forward.7} parent=0 // pred_fallthru
    _

// kernel: faster_rcnn_forward.8
$region0: #{faster_rcnn_forward.8}
  #allocation0 [shape = 'u32[]', space=smem, size = 0x4, offset = 0x4, fixed_abs, tag = 'smem constant byte address 0x4 - core index']
  #allocation1 [shape = 'u32[72,128]{1,0:T(1,128)}', space=vmem, size = 0x9000, scoped, tag = 'internal scratch']
  #allocation2 [shape = 'f32[128,128]{1,0:T(8,128)}', space=vmem, size = 0x10000, scoped, tag = 'scratch operand']
  %s0 = inlined_call_operand.vmem [shape: f32[128,128], index: 0, kind: input, shape index: {}]
  %s1 = inlined_call_operand.vmem [shape: f32[128,128], index: 1, kind: input, shape index: {}]
  %s2 = inlined_call_operand.vmem [shape: f32[1,128], index: 2, kind: input, shape index: {}]
  %s3 = inlined_call_operand.vmem [shape: f32[128,128], index: 3, kind: output, shape index: {}]
  %s4 = sld [smem:[#allocation0]]
  $region30: #{faster_rcnn_forward.8} parent=0
    _
  %s6 = ssub.s32 1, %s4
  %s7 = scalar_select 0, %s6, %s4
  // Predicated region
  $region2: #{faster_rcnn_forward.8} parent=0 // pred_check
    _
  $region3: #{faster_rcnn_forward.8} parent=0 // pred_check_branch
    %9 = sbr.rel (0) target = $region5
  $region4: #{faster_rcnn_forward.8} parent=0 // pred_region
    _
  $region5: #{faster_rcnn_forward.8} parent=0 // pred_fallthru
    _
  // Predicated region
  $region6: #{faster_rcnn_forward.8} parent=0 // pred_check
    _
  $region7: #{faster_rcnn_forward.8} parent=0 // pred_check_branch
    %11 = sbr.rel (0) target = $region9
  $region8: #{faster_rcnn_forward.8} parent=0 // pred_region
    _
  $region9: #{faster_rcnn_forward.8} parent=0 // pred_fallthru
    _
  // Predicated region
  $region10: #{faster_rcnn_forward.8} parent=0 // pred_check
    _
  $region11: #{faster_rcnn_forward.8} parent=0 // pred_check_branch
    %13 = sbr.rel (0) target = $region13
  $region12: #{faster_rcnn_forward.8} parent=0 // pred_region
    _
  $region13: #{faster_rcnn_forward.8} parent=0 // pred_fallthru
    _
  %p14 = scmp.eq.s32.totalorder 0, 0
  // Predicated region
  $region14: #{faster_rcnn_forward.8} parent=0 // pred_check
    %p15 = pneg %p14
  $region15: #{faster_rcnn_forward.8} parent=0 // pred_check_branch
    %17 = sbr.rel (%p15) target = $region17
  $region16: #{faster_rcnn_forward.8} parent=0 // pred_region
    %18 = vst [vmem:[#allocation2] sm:$0xff] 0.0
    %19 = vst [vmem:[#allocation2 + $0x8] sm:$0xff] 0.0
    %20 = vst [vmem:[#allocation2 + $0x10] sm:$0xff] 0.0
    %21 = vst [vmem:[#allocation2 + $0x18] sm:$0xff] 0.0
    %22 = vst [vmem:[#allocation2 + $0x20] sm:$0xff] 0.0
    %23 = vst [vmem:[#allocation2 + $0x28] sm:$0xff] 0.0
    %24 = vst [vmem:[#allocation2 + $0x30] sm:$0xff] 0.0
    %25 = vst [vmem:[#allocation2 + $0x38] sm:$0xff] 0.0
    %26 = vst [vmem:[#allocation2 + $0x40] sm:$0xff] 0.0
    %27 = vst [vmem:[#allocation2 + $0x48] sm:$0xff] 0.0
    %28 = vst [vmem:[#allocation2 + $0x50] sm:$0xff] 0.0
    %29 = vst [vmem:[#allocation2 + $0x58] sm:$0xff] 0.0
    %30 = vst [vmem:[#allocation2 + $0x60] sm:$0xff] 0.0
    %31 = vst [vmem:[#allocation2 + $0x68] sm:$0xff] 0.0
    %32 = vst [vmem:[#allocation2 + $0x70] sm:$0xff] 0.0
    %33 = vst [vmem:[#allocation2 + $0x78] sm:$0xff] 0.0
  $region17: #{faster_rcnn_forward.8} parent=0 // pred_fallthru
    _
  %v34 = vld [vmem:[#allocation2] sm:$0xff]
  %v35 = vld [vmem:[#allocation2 + $0x8] sm:$0xff]
  %v36 = vld [vmem:[#allocation2 + $0x10] sm:$0xff]
  %v37 = vld [vmem:[#allocation2 + $0x18] sm:$0xff]
  %v38 = vld [vmem:[#allocation2 + $0x20] sm:$0xff]
  %v39 = vld [vmem:[#allocation2 + $0x28] sm:$0xff]
  %v40 = vld [vmem:[#allocation2 + $0x30] sm:$0xff]
  %v41 = vld [vmem:[#allocation2 + $0x38] sm:$0xff]
  %v42 = vld [vmem:[#allocation2 + $0x40] sm:$0xff]
  %v43 = vld [vmem:[#allocation2 + $0x48] sm:$0xff]
  %v44 = vld [vmem:[#allocation2 + $0x50] sm:$0xff]
  %v45 = vld [vmem:[#allocation2 + $0x58] sm:$0xff]
  %v46 = vld [vmem:[#allocation2 + $0x60] sm:$0xff]
  %v47 = vld [vmem:[#allocation2 + $0x68] sm:$0xff]
  %v48 = vld [vmem:[#allocation2 + $0x70] sm:$0xff]
  %v49 = vld [vmem:[#allocation2 + $0x78] sm:$0xff]
  %v50 = vld [vmem:[%s0] sm:$0xff]
  %v51 = vld [vmem:[%s0 + $0x8] sm:$0xff]
  %v52 = vld [vmem:[%s0 + $0x10] sm:$0xff]
  %v53 = vld [vmem:[%s0 + $0x18] sm:$0xff]
  %v54 = vld [vmem:[%s0 + $0x20] sm:$0xff]
  %v55 = vld [vmem:[%s0 + $0x28] sm:$0xff]
  %v56 = vld [vmem:[%s0 + $0x30] sm:$0xff]
  %v57 = vld [vmem:[%s0 + $0x38] sm:$0xff]
  %v58 = vld [vmem:[%s0 + $0x40] sm:$0xff]
  %v59 = vld [vmem:[%s0 + $0x48] sm:$0xff]
  %v60 = vld [vmem:[%s0 + $0x50] sm:$0xff]
  %v61 = vld [vmem:[%s0 + $0x58] sm:$0xff]
  %v62 = vld [vmem:[%s0 + $0x60] sm:$0xff]
  %v63 = vld [vmem:[%s0 + $0x68] sm:$0xff]
  %v64 = vld [vmem:[%s0 + $0x70] sm:$0xff]
  %v65 = vld [vmem:[%s0 + $0x78] sm:$0xff]
  %v66 = vld [vmem:[%s1] sm:$0xff]
  %v67 = vld [vmem:[%s1 + $0x8] sm:$0xff]
  %v68 = vld [vmem:[%s1 + $0x10] sm:$0xff]
  %v69 = vld [vmem:[%s1 + $0x18] sm:$0xff]
  %v70 = vld [vmem:[%s1 + $0x20] sm:$0xff]
  %v71 = vld [vmem:[%s1 + $0x28] sm:$0xff]
  %v72 = vld [vmem:[%s1 + $0x30] sm:$0xff]
  %v73 = vld [vmem:[%s1 + $0x38] sm:$0xff]
  %v74 = vld [vmem:[%s1 + $0x40] sm:$0xff]
  %v75 = vld [vmem:[%s1 + $0x48] sm:$0xff]
  %v76 = vld [vmem:[%s1 + $0x50] sm:$0xff]
  %v77 = vld [vmem:[%s1 + $0x58] sm:$0xff]
  %v78 = vld [vmem:[%s1 + $0x60] sm:$0xff]
  %v79 = vld [vmem:[%s1 + $0x68] sm:$0xff]
  %v80 = vld [vmem:[%s1 + $0x70] sm:$0xff]
  %v81 = vld [vmem:[%s1 + $0x78] sm:$0xff]
  %82 = vmatpush.msra.mxu0 %v81
  %83 = vmatpush.msra.mxu0 %v80
  %84 = vmatpush.msra.mxu0 %v79
  %85 = vmatpush.msra.mxu0 %v78
  %86 = vmatpush.msra.mxu0 %v77
  %87 = vmatpush.msra.mxu0 %v76
  %88 = vmatpush.msra.mxu0 %v75
  %89 = vmatpush.msra.mxu0 %v74
  %90 = vmatpush.msra.mxu0 %v73
  %91 = vmatpush.msra.mxu0 %v72
  %92 = vmatpush.msra.mxu0 %v71
  %93 = vmatpush.msra.mxu0 %v70
  %94 = vmatpush.msra.mxu0 %v69
  %95 = vmatpush.msra.mxu0 %v68
  %96 = vmatpush.msra.mxu0 %v67
  %97 = vmatpush.msra.mxu0 %v66
  %98 = vmatmul.f32.gmra.mxu0 %v50
  %v99 = vpop.f32.mrf.mxu0
  %v100 = vadd.f32 0.0, %v99
  %101 = vmatmul.f32.gmra.mxu0 %v51
  %v102 = vpop.f32.mrf.mxu0
  %v103 = vadd.f32 0.0, %v102
  %104 = vmatmul.f32.gmra.mxu0 %v52
  %v105 = vpop.f32.mrf.mxu0
  %v106 = vadd.f32 0.0, %v105
  %107 = vmatmul.f32.gmra.mxu0 %v53
  %v108 = vpop.f32.mrf.mxu0
  %v109 = vadd.f32 0.0, %v108
  %110 = vmatmul.f32.gmra.mxu0 %v54
  %v111 = vpop.f32.mrf.mxu0
  %v112 = vadd.f32 0.0, %v111
  %113 = vmatmul.f32.gmra.mxu0 %v55
  %v114 = vpop.f32.mrf.mxu0
  %v115 = vadd.f32 0.0, %v114
  %116 = vmatmul.f32.gmra.mxu0 %v56
  %v117 = vpop.f32.mrf.mxu0
  %v118 = vadd.f32 0.0, %v117
  %119 = vmatmul.f32.gmra.mxu0 %v57
  %v120 = vpop.f32.mrf.mxu0
  %v121 = vadd.f32 0.0, %v120
  %122 = vmatmul.f32.gmra.mxu0 %v58
  %v123 = vpop.f32.mrf.mxu0
  %v124 = vadd.f32 0.0, %v123
  %125 = vmatmul.f32.gmra.mxu0 %v59
  %v126 = vpop.f32.mrf.mxu0
  %v127 = vadd.f32 0.0, %v126
  %128 = vmatmul.f32.gmra.mxu0 %v60
  %v129 = vpop.f32.mrf.mxu0
  %v130 = vadd.f32 0.0, %v129
  %131 = vmatmul.f32.gmra.mxu0 %v61
  %v132 = vpop.f32.mrf.mxu0
  %v133 = vadd.f32 0.0, %v132
  %134 = vmatmul.f32.gmra.mxu0 %v62
  %v135 = vpop.f32.mrf.mxu0
  %v136 = vadd.f32 0.0, %v135
  %137 = vmatmul.f32.gmra.mxu0 %v63
  %v138 = vpop.f32.mrf.mxu0
  %v139 = vadd.f32 0.0, %v138
  %140 = vmatmul.f32.gmra.mxu0 %v64
  %v141 = vpop.f32.mrf.mxu0
  %v142 = vadd.f32 0.0, %v141
  %143 = vmatmul.f32.gmra.mxu0 %v65
  %v144 = vpop.f32.mrf.mxu0
  %v145 = vadd.f32 0.0, %v144
  %146 = vdwg.mxu0
  %v147 = vadd.f32 %v34, %v100
  %v148 = vadd.f32 %v35, %v103
  %v149 = vadd.f32 %v36, %v106
  %v150 = vadd.f32 %v37, %v109
  %v151 = vadd.f32 %v38, %v112
  %v152 = vadd.f32 %v39, %v115
  %v153 = vadd.f32 %v40, %v118
  %v154 = vadd.f32 %v41, %v121
  %v155 = vadd.f32 %v42, %v124
  %v156 = vadd.f32 %v43, %v127
  %v157 = vadd.f32 %v44, %v130
  %v158 = vadd.f32 %v45, %v133
  %v159 = vadd.f32 %v46, %v136
  %v160 = vadd.f32 %v47, %v139
  %v161 = vadd.f32 %v48, %v142
  %v162 = vadd.f32 %v49, %v145
  %163 = vst [vmem:[#allocation2] sm:$0xff] %v147
  %164 = vst [vmem:[#allocation2 + $0x8] sm:$0xff] %v148
  %165 = vst [vmem:[#allocation2 + $0x10] sm:$0xff] %v149
  %166 = vst [vmem:[#allocation2 + $0x18] sm:$0xff] %v150
  %167 = vst [vmem:[#allocation2 + $0x20] sm:$0xff] %v151
  %168 = vst [vmem:[#allocation2 + $0x28] sm:$0xff] %v152
  %169 = vst [vmem:[#allocation2 + $0x30] sm:$0xff] %v153
  %170 = vst [vmem:[#allocation2 + $0x38] sm:$0xff] %v154
  %171 = vst [vmem:[#allocation2 + $0x40] sm:$0xff] %v155
  %172 = vst [vmem:[#allocation2 + $0x48] sm:$0xff] %v156
  %173 = vst [vmem:[#allocation2 + $0x50] sm:$0xff] %v157
  %174 = vst [vmem:[#allocation2 + $0x58] sm:$0xff] %v158
  %175 = vst [vmem:[#allocation2 + $0x60] sm:$0xff] %v159
  %176 = vst [vmem:[#allocation2 + $0x68] sm:$0xff] %v160
  %177 = vst [vmem:[#allocation2 + $0x70] sm:$0xff] %v161
  %178 = vst [vmem:[#allocation2 + $0x78] sm:$0xff] %v162
  // Predicated region
  $region18: #{faster_rcnn_forward.8} parent=0 // pred_check
    %p179 = pneg %p14
  $region19: #{faster_rcnn_forward.8} parent=0 // pred_check_branch
    %181 = sbr.rel (%p179) target = $region21
  $region20: #{faster_rcnn_forward.8} parent=0 // pred_region
    %v182 = vld [vmem:[#allocation2] sm:$0xff]
    %v183 = vld [vmem:[#allocation2 + $0x8] sm:$0xff]
    %v184 = vld [vmem:[#allocation2 + $0x10] sm:$0xff]
    %v185 = vld [vmem:[#allocation2 + $0x18] sm:$0xff]
    %v186 = vld [vmem:[#allocation2 + $0x20] sm:$0xff]
    %v187 = vld [vmem:[#allocation2 + $0x28] sm:$0xff]
    %v188 = vld [vmem:[#allocation2 + $0x30] sm:$0xff]
    %v189 = vld [vmem:[#allocation2 + $0x38] sm:$0xff]
    %v190 = vld [vmem:[#allocation2 + $0x40] sm:$0xff]
    %v191 = vld [vmem:[#allocation2 + $0x48] sm:$0xff]
    %v192 = vld [vmem:[#allocation2 + $0x50] sm:$0xff]
    %v193 = vld [vmem:[#allocation2 + $0x58] sm:$0xff]
    %v194 = vld [vmem:[#allocation2 + $0x60] sm:$0xff]
    %v195 = vld [vmem:[#allocation2 + $0x68] sm:$0xff]
    %v196 = vld [vmem:[#allocation2 + $0x70] sm:$0xff]
    %v197 = vld [vmem:[#allocation2 + $0x78] sm:$0xff]
    %v198 = vld [vmem:[%s2] sm:$0x1]
    %v200 = vperm.slane %v198, 0
    %v202 = vadd.f32 %v182, %v200
    %v203 = vadd.f32 %v183, %v200
    %v204 = vadd.f32 %v184, %v200
    %v205 = vadd.f32 %v185, %v200
    %v206 = vadd.f32 %v186, %v200
    %v207 = vadd.f32 %v187, %v200
    %v208 = vadd.f32 %v188, %v200
    %v209 = vadd.f32 %v189, %v200
    %v210 = vadd.f32 %v190, %v200
    %v211 = vadd.f32 %v191, %v200
    %v212 = vadd.f32 %v192, %v200
    %v213 = vadd.f32 %v193, %v200
    %v214 = vadd.f32 %v194, %v200
    %v215 = vadd.f32 %v195, %v200
    %v216 = vadd.f32 %v196, %v200
    %v217 = vadd.f32 %v197, %v200
    %218 = vst [vmem:[%s3] sm:$0xff] %v202
    %219 = vst [vmem:[%s3 + $0x8] sm:$0xff] %v203
    %220 = vst [vmem:[%s3 + $0x10] sm:$0xff] %v204
    %221 = vst [vmem:[%s3 + $0x18] sm:$0xff] %v205
    %222 = vst [vmem:[%s3 + $0x20] sm:$0xff] %v206
    %223 = vst [vmem:[%s3 + $0x28] sm:$0xff] %v207
    %224 = vst [vmem:[%s3 + $0x30] sm:$0xff] %v208
    %225 = vst [vmem:[%s3 + $0x38] sm:$0xff] %v209
    %226 = vst [vmem:[%s3 + $0x40] sm:$0xff] %v210
    %227 = vst [vmem:[%s3 + $0x48] sm:$0xff] %v211
    %228 = vst [vmem:[%s3 + $0x50] sm:$0xff] %v212
    %229 = vst [vmem:[%s3 + $0x58] sm:$0xff] %v213
    %230 = vst [vmem:[%s3 + $0x60] sm:$0xff] %v214
    %231 = vst [vmem:[%s3 + $0x68] sm:$0xff] %v215
    %232 = vst [vmem:[%s3 + $0x70] sm:$0xff] %v216
    %233 = vst [vmem:[%s3 + $0x78] sm:$0xff] %v217
  $region21: #{faster_rcnn_forward.8} parent=0 // pred_fallthru
    _
  // Predicated region
  $region22: #{faster_rcnn_forward.8} parent=0 // pred_check
    _
  $region23: #{faster_rcnn_forward.8} parent=0 // pred_check_branch
    %235 = sbr.rel (0) target = $region25
  $region24: #{faster_rcnn_forward.8} parent=0 // pred_region
    _
  $region25: #{faster_rcnn_forward.8} parent=0 // pred_fallthru
    _
  // Predicated region
  $region26: #{faster_rcnn_forward.8} parent=0 // pred_check
    _
  $region27: #{faster_rcnn_forward.8} parent=0 // pred_check_branch
    %237 = sbr.rel (0) target = $region29
  $region28: #{faster_rcnn_forward.8} parent=0 // pred_region
    _
  $region29: #{faster_rcnn_forward.8} parent=0 // pred_fallthru
    _

// kernel: faster_rcnn_forward.9
$region0: #{faster_rcnn_forward.9}
  #allocation0 [shape = 'u32[]', space=smem, size = 0x4, offset = 0x4, fixed_abs, tag = 'smem constant byte address 0x4 - core index']
  #allocation1 [shape = 'u32[72,128]{1,0:T(1,128)}', space=vmem, size = 0x9000, scoped, tag = 'internal scratch']
  %s0 = inlined_call_operand.vmem [shape: f32[8,256], index: 0, kind: input, shape index: {}]
  %s1 = inlined_call_operand.vmem [shape: f32[256,32], index: 1, kind: input, shape index: {}]
  %s2 = inlined_call_operand.vmem [shape: f32[1,32], index: 2, kind: input, shape index: {}]
  %s3 = inlined_call_operand.vmem [shape: f32[32,20], index: 3, kind: input, shape index: {}]
  %s4 = inlined_call_operand.vmem [shape: f32[1,20], index: 4, kind: input, shape index: {}]
  %s5 = inlined_call_operand.vmem [shape: f32[8,4], index: 5, kind: output, shape index: {0}]
  %s6 = inlined_call_operand.hbm [shape: f32[8,16], index: 6, kind: output, shape index: {1}]
  %7 = xla_tuple %s5, %s6
  %s8 = sld [smem:[#allocation0]]
  $region38: #{faster_rcnn_forward.9} parent=0
    _
  %s10 = ssub.s32 1, %s8
  %s11 = scalar_select 0, %s10, %s8
  $region1: #{faster_rcnn_forward.9} parent=0
    #allocation2 [shape = 'u8[4096]{0}', space=vmem, size = 0x1000, scoped, tag = 'output window, operand 1, single buffered']
    #allocation3 [shape = 's32[1]{0}', space=sflag, size = 0x4, scoped, tag = 'scoped memory for faster_rcnn_forward.9']
    %12 = vsyncpa [#allocation3], 0
    // Predicated region
    $region2: #{faster_rcnn_forward.9} parent=1 // pred_check
      _
    $region3: #{faster_rcnn_forward.9} parent=1 // pred_check_branch
      %14 = sbr.rel (0) target = $region5
    $region4: #{faster_rcnn_forward.9} parent=1 // pred_region
      _
    $region5: #{faster_rcnn_forward.9} parent=1 // pred_fallthru
      _
    // Predicated region
    $region6: #{faster_rcnn_forward.9} parent=1 // pred_check
      _
    $region7: #{faster_rcnn_forward.9} parent=1 // pred_check_branch
      %16 = sbr.rel (0) target = $region9
    $region8: #{faster_rcnn_forward.9} parent=1 // pred_region
      _
    $region9: #{faster_rcnn_forward.9} parent=1 // pred_fallthru
      _
    // Predicated region
    $region10: #{faster_rcnn_forward.9} parent=1 // pred_check
      _
    $region11: #{faster_rcnn_forward.9} parent=1 // pred_check_branch
      %18 = sbr.rel (0) target = $region13
    $region12: #{faster_rcnn_forward.9} parent=1 // pred_region
      _
    $region13: #{faster_rcnn_forward.9} parent=1 // pred_fallthru
      _
    // Predicated region
    $region14: #{faster_rcnn_forward.9} parent=1 // pred_check
      _
    $region15: #{faster_rcnn_forward.9} parent=1 // pred_check_branch
      %20 = sbr.rel (0) target = $region17
    $region16: #{faster_rcnn_forward.9} parent=1 // pred_region
      _
    $region17: #{faster_rcnn_forward.9} parent=1 // pred_fallthru
      _
    // Predicated region
    $region18: #{faster_rcnn_forward.9} parent=1 // pred_check
      _
    $region19: #{faster_rcnn_forward.9} parent=1 // pred_check_branch
      %22 = sbr.rel (0) target = $region21
    $region20: #{faster_rcnn_forward.9} parent=1 // pred_region
      _
    $region21: #{faster_rcnn_forward.9} parent=1 // pred_fallthru
      _
    %v23 = vld [vmem:[%s0] sm:$0xff]
    %v24 = vld [vmem:[%s0 + $0x8] sm:$0xff]
    %v25 = vld [vmem:[%s1] sm:$0xff]
    %v26 = vld [vmem:[%s1 + $0x8] sm:$0xff]
    %v27 = vld [vmem:[%s1 + $0x10] sm:$0xff]
    %v28 = vld [vmem:[%s1 + $0x18] sm:$0xff]
    %v29 = vld [vmem:[%s1 + $0x20] sm:$0xff]
    %v30 = vld [vmem:[%s1 + $0x28] sm:$0xff]
    %v31 = vld [vmem:[%s1 + $0x30] sm:$0xff]
    %v32 = vld [vmem:[%s1 + $0x38] sm:$0xff]
    %v33 = vld [vmem:[%s1 + $0x40] sm:$0xff]
    %v34 = vld [vmem:[%s1 + $0x48] sm:$0xff]
    %v35 = vld [vmem:[%s1 + $0x50] sm:$0xff]
    %v36 = vld [vmem:[%s1 + $0x58] sm:$0xff]
    %v37 = vld [vmem:[%s1 + $0x60] sm:$0xff]
    %v38 = vld [vmem:[%s1 + $0x68] sm:$0xff]
    %v39 = vld [vmem:[%s1 + $0x70] sm:$0xff]
    %v40 = vld [vmem:[%s1 + $0x78] sm:$0xff]
    %v41 = vld [vmem:[%s1 + $0x80] sm:$0xff]
    %v42 = vld [vmem:[%s1 + $0x88] sm:$0xff]
    %v43 = vld [vmem:[%s1 + $0x90] sm:$0xff]
    %v44 = vld [vmem:[%s1 + $0x98] sm:$0xff]
    %v45 = vld [vmem:[%s1 + $0xa0] sm:$0xff]
    %v46 = vld [vmem:[%s1 + $0xa8] sm:$0xff]
    %v47 = vld [vmem:[%s1 + $0xb0] sm:$0xff]
    %v48 = vld [vmem:[%s1 + $0xb8] sm:$0xff]
    %v49 = vld [vmem:[%s1 + $0xc0] sm:$0xff]
    %v50 = vld [vmem:[%s1 + $0xc8] sm:$0xff]
    %v51 = vld [vmem:[%s1 + $0xd0] sm:$0xff]
    %v52 = vld [vmem:[%s1 + $0xd8] sm:$0xff]
    %v53 = vld [vmem:[%s1 + $0xe0] sm:$0xff]
    %v54 = vld [vmem:[%s1 + $0xe8] sm:$0xff]
    %v55 = vld [vmem:[%s1 + $0xf0] sm:$0xff]
    %v56 = vld [vmem:[%s1 + $0xf8] sm:$0xff]
    %v57 = vld [vmem:[%s2] sm:$0x1]
    %v59 = vperm.slane %v57, 0
    %61 = vmatpush.msra.mxu0 %v40
    %62 = vmatpush.msra.mxu0 %v39
    %63 = vmatpush.msra.mxu0 %v38
    %64 = vmatpush.msra.mxu0 %v37
    %65 = vmatpush.msra.mxu0 %v36
    %66 = vmatpush.msra.mxu0 %v35
    %67 = vmatpush.msra.mxu0 %v34
    %68 = vmatpush.msra.mxu0 %v33
    %69 = vmatpush.msra.mxu0 %v32
    %70 = vmatpush.msra.mxu0 %v31
    %71 = vmatpush.msra.mxu0 %v30
    %72 = vmatpush.msra.mxu0 %v29
    %73 = vmatpush.msra.mxu0 %v28
    %74 = vmatpush.msra.mxu0 %v27
    %75 = vmatpush.msra.mxu0 %v26
    %76 = vmatpush.msra.mxu0 %v25
    %77 = vmatmul.f32.gmra.mxu0 %v23
    %v78 = vpop.f32.mrf.mxu0
    %v79 = vadd.f32 %v59, %v78
    %80 = vdwg.mxu0
    %81 = vmatpush.msra.mxu0 %v56
    %82 = vmatpush.msra.mxu0 %v55
    %83 = vmatpush.msra.mxu0 %v54
    %84 = vmatpush.msra.mxu0 %v53
    %85 = vmatpush.msra.mxu0 %v52
    %86 = vmatpush.msra.mxu0 %v51
    %87 = vmatpush.msra.mxu0 %v50
    %88 = vmatpush.msra.mxu0 %v49
    %89 = vmatpush.msra.mxu0 %v48
    %90 = vmatpush.msra.mxu0 %v47
    %91 = vmatpush.msra.mxu0 %v46
    %92 = vmatpush.msra.mxu0 %v45
    %93 = vmatpush.msra.mxu0 %v44
    %94 = vmatpush.msra.mxu0 %v43
    %95 = vmatpush.msra.mxu0 %v42
    %96 = vmatpush.msra.mxu0 %v41
    %97 = vmatmul.f32.gmra.mxu0 %v24
    %v98 = vpop.f32.mrf.mxu0
    %v99 = vadd.f32 %v79, %v98
    %100 = vdwg.mxu0
    %v101 = vmax.f32 %v99, 0.0
    %v102 = vld [vmem:[%s3] sm:$0xff]
    %v103 = vld [vmem:[%s3 + $0x8] sm:$0xff]
    %v104 = vld [vmem:[%s3 + $0x10] sm:$0xff]
    %v105 = vld [vmem:[%s3 + $0x18] sm:$0xff]
    %v106 = vld [vmem:[%s4] sm:$0x1]
    %v108 = vperm.slane %v106, 0
    %vm110 = vcmask 261120
    %v112 = vsel %vm110, %v101, 0
    %114 = vmatpush.msra.mxu0 0.0
    %115 = vmatpush.msra.mxu0 0.0
    %116 = vmatpush.msra.mxu0 0.0
    %117 = vmatpush.msra.mxu0 0.0
    %118 = vmatpush.msra.mxu0 0.0
    %119 = vmatpush.msra.mxu0 0.0
    %120 = vmatpush.msra.mxu0 0.0
    %121 = vmatpush.msra.mxu0 0.0
    %122 = vmatpush.msra.mxu0 0.0
    %123 = vmatpush.msra.mxu0 0.0
    %124 = vmatpush.msra.mxu0 0.0
    %125 = vmatpush.msra.mxu0 0.0
    %126 = vmatpush.msra.mxu0 %v105
    %127 = vmatpush.msra.mxu0 %v104
    %128 = vmatpush.msra.mxu0 %v103
    %129 = vmatpush.msra.mxu0 %v102
    %130 = vmatmul.f32.gmra.mxu0 %v112
    %v131 = vpop.f32.mrf.mxu0
    %v132 = vadd.f32 %v108, %v131
    %133 = vdwg.mxu0
    %vm134 = vcmask 31744
    %v135 = vsel %vm134, %v132, -inf
    %136 = vmax.xlane.f32.xlu0 %v135
    %v137 = vpop.xlane.xlu0 %136
    %v138 = vsub.f32 %v132, %v137
    %v139 = vmul.f32 %v138, 1.442695
    %v140 = vpow.pop %v139
    %v141 = vsel %vm134, %v140, 0.0
    %142 = vadd.xlane.f32.xlu0 %v141
    %v143 = vpop.xlane.xlu0 %142
    %v144 = vrcp.pop %v143
    %v145 = vmul.f32 %v143, %v144
    %v146 = vsub.f32 1.0, %v145
    %v147 = vmul.f32 %v144, %v146
    %v148 = vadd.f32 %v144, %v147
    %vm149 = vweird.f32 %v143
    %vm150 = vweird.f32 %v144
    %vm151 = vmor %vm149, %vm150
    %v152 = vsel %vm151, %v144, %v148
    %v153 = vand.u32 2147483647, %v143
    %vm154 = vcmp.eq.f32.partialorder %v153, 8.507059e+37
    %v155 = vand.u32 %v143, 2147483648
    %v156 = vor.u32 1.1754944e-38, %v155
    %v157 = vsel %vm154, %v156, %v152
    %v158 = vmul.f32 %v140, %v157
    %159 = vst.msk [vmem:[%s5] sm:$0xff] %vm134, %v158
    %161 = vrot.lane.b32.xlu0 %v132, 124
    %v162 = vpop.permute.xlu0 %161
    %vm164 = vcmask 130048
    %165 = vst.msk [vmem:[#allocation2] sm:$0xff] %vm164, %v162
    // Predicated region
    $region22: #{faster_rcnn_forward.9} parent=1 // pred_check
      _
    $region23: #{faster_rcnn_forward.9} parent=1 // pred_check_branch
      %167 = sbr.rel (0) target = $region25
    $region24: #{faster_rcnn_forward.9} parent=1 // pred_region
      _
    $region25: #{faster_rcnn_forward.9} parent=1 // pred_fallthru
      _
    // Predicated region
    $region26: #{faster_rcnn_forward.9} parent=1 // pred_check
      _
    $region27: #{faster_rcnn_forward.9} parent=1 // pred_check_branch
      %169 = sbr.rel (0) target = $region29
    $region28: #{faster_rcnn_forward.9} parent=1 // pred_region
      %171 = vsyncadd [#allocation3], 0
      %s173 = sshll.u32 [#allocation2], 4
      %s174 = int_to_ptr.vmem [resolvable:$true] %s173
      %s175 = sshll.u32 %s6, 4
      %s176 = int_to_ptr.hbm [resolvable:$true] %s175
      %178 = dma.vmem_to_hbm [thread:$0]  %s174, 128, %s176, [#allocation3]
    $region29: #{faster_rcnn_forward.9} parent=1 // pred_fallthru
      _
    // Predicated region
    $region30: #{faster_rcnn_forward.9} parent=1 // pred_check
      _
    $region31: #{faster_rcnn_forward.9} parent=1 // pred_check_branch
      %180 = sbr.rel (0) target = $region33
    $region32: #{faster_rcnn_forward.9} parent=1 // pred_region
      _
    $region33: #{faster_rcnn_forward.9} parent=1 // pred_fallthru
      _
    // Predicated region
    $region34: #{faster_rcnn_forward.9} parent=1 // pred_check
      _
    $region35: #{faster_rcnn_forward.9} parent=1 // pred_check_branch
      %182 = sbr.rel (0) target = $region37
    $region36: #{faster_rcnn_forward.9} parent=1 // pred_region
      %184 = dma.done [#allocation3], 128
    $region37: #{faster_rcnn_forward.9} parent=1 // pred_fallthru
      _
    %185 = vsyncpa [#allocation3], 1

</llo_original>
